<compile_context>
chip_gen: v7x
topology: tpu7x:2x2x1
jax: 0.10.0
libtpu: 0.0.40
codegen_flags: <defaults>
</compile_context>

<pallas_src>
import math
from functools import partial

import jax
import jax.numpy as jnp
from jax import lax
from jax.experimental import pallas as pl
from jax.experimental.pallas import tpu as pltpu


def _self_attention_kernel(scale, num_heads, head_dim,
                           h_ref, wq_ref, bq_ref, wk_ref, bk_ref, wv_ref, bv_ref,
                           mask_ref, ctx_ref, probs_ref):
    # Current batch tile; feature axes are lane-mapped. bf16 operands for MXU.
    x = h_ref[0].astype(jnp.bfloat16)                       # [S, H]
    wq = wq_ref[...].astype(jnp.bfloat16)                   # [H, H]
    wk = wk_ref[...].astype(jnp.bfloat16)
    wv = wv_ref[...].astype(jnp.bfloat16)

    # Full-width projections for ALL heads at once (bf16 operands, f32 accum).
    # Scale is folded into q right after the projection (S*hd VPU mults).
    q = (jnp.dot(x, wq, preferred_element_type=jnp.float32) + bq_ref[...]) * scale
    k = jnp.dot(x, wk, preferred_element_type=jnp.float32) + bk_ref[...]
    v = jnp.dot(x, wv, preferred_element_type=jnp.float32) + bv_ref[...]

    qb = q.astype(jnp.bfloat16)                              # [S, H]
    kb = k.astype(jnp.bfloat16)
    vb = v.astype(jnp.bfloat16)

    mask = mask_ref[0]                                       # [1, S], broadcast over rows

    ctx_parts = []
    for h in range(num_heads):                               # static unroll, static slices
        sl = slice(h * head_dim, (h + 1) * head_dim)
        qh, kh, vh = qb[:, sl], kb[:, sl], vb[:, sl]         # [S, hd] each

        # scores[S,S] = q_h @ k_h^T  (contract lane dims; bf16 MXU, f32 accum)
        s = lax.dot_general(qh, kh, (((1,), (1,)), ((), ())),
                            preferred_element_type=jnp.float32)
        s = s + mask

        # Numerically stable, exact softmax in f32 (module returns these probs).
        m = jnp.max(s, axis=-1, keepdims=True)
        e = jnp.exp(s - m)
        l = jnp.sum(e, axis=-1, keepdims=True)
        p = e * pl.reciprocal(l, approx=False)               # [S,1] recip + [S,S] mul

        probs_ref[0, h] = p.astype(probs_ref.dtype)

        # TODO(synk): training-mode dropout on attention probs not emitted;
        # inference identity is used (matches module.eval()).

        ctx_parts.append(jnp.dot(p.astype(jnp.bfloat16), vh,
                                 preferred_element_type=jnp.float32))

    # Single lane-dense store of the merged-head context [S, H].
    ctx_ref[0] = jnp.concatenate(ctx_parts, axis=-1).astype(ctx_ref.dtype)


def self_attention(hidden_states, attention_mask, wq, bq, wk, bk, wv, bv, num_heads):
    """hidden_states: [B, S, H] f32; attention_mask: [B, 1, 1, S] additive mask;
    wq/wk/wv: [H, H] (input-major, i.e. torch nn.Linear weight transposed);
    bq/bk/bv: [H]. Returns (context [B, S, H], attention_probs [B, nh, S, S])."""
    B, S, H = hidden_states.shape
    nh = num_heads
    assert H % nh == 0, "hidden size must be divisible by num_heads"
    hd = H // nh
    scale = 1.0 / math.sqrt(hd)

    mask2 = attention_mask.reshape(B, 1, S).astype(jnp.float32)
    bq2, bk2, bv2 = (b.reshape(1, H) for b in (bq, bk, bv))

    x_spec = pl.BlockSpec((1, S, H), lambda b: (b, 0, 0))
    w_spec = pl.BlockSpec((H, H), lambda b: (0, 0))          # resident: fetched once
    b_spec = pl.BlockSpec((1, H), lambda b: (0, 0))
    m_spec = pl.BlockSpec((1, 1, S), lambda b: (b, 0, 0))
    ctx_spec = pl.BlockSpec((1, S, H), lambda b: (b, 0, 0))  # merged layout, no XLA transpose
    prob_spec = pl.BlockSpec((1, nh, S, S), lambda b: (b, 0, 0, 0))

    flops = 6 * B * S * H * H + 4 * B * nh * S * S * hd
    bytes_accessed = 4 * (B * S * H            # hidden_states in
                          + 3 * H * H + 3 * H  # weights/biases (fetched once)
                          + B * S              # mask
                          + B * nh * S * S     # probs out
                          + B * S * H)         # context out (merged)
    cost = pl.CostEstimate(flops=flops,
                           transcendentals=B * nh * S * S,
                           bytes_accessed=bytes_accessed)

    ctx, probs = pl.pallas_call(
        partial(_self_attention_kernel, scale, nh, hd),
        out_shape=(jax.ShapeDtypeStruct((B, S, H), jnp.float32),
                   jax.ShapeDtypeStruct((B, nh, S, S), jnp.float32)),
        grid_spec=pltpu.PrefetchScalarGridSpec(
            num_scalar_prefetch=0,
            grid=(B,),
            in_specs=[x_spec, w_spec, b_spec, w_spec, b_spec, w_spec, b_spec,
                      m_spec],
            out_specs=(ctx_spec, prob_spec),
        ),
        compiler_params=pltpu.CompilerParams(
            dimension_semantics=("parallel",),
            vmem_limit_bytes=32 * 1024 * 1024),
        cost_estimate=cost,
    )(hidden_states, wq, bq2, wk, bk2, wv, bv2, mask2)

    return ctx, probs


if __name__ == "__main__":
    # Small but TPU-aligned shapes implied by the module:
    # batch=2, seq=128, hidden=256, heads=2 -> head_dim=128 (lane-dense).
    B, S, H, NH = 2, 128, 256, 2
    HD = H // NH

    key = jax.random.PRNGKey(0)
    ks = jax.random.split(key, 7)

    hidden_states = jax.random.normal(ks[0], (B, S, H), dtype=jnp.float32)

    # Additive attention mask (BERT convention): 0 = visible, -1e9 = masked.
    lengths = jnp.array([S, S - 32], dtype=jnp.int32)
    visible = (jnp.arange(S)[None, :] < lengths[:, None]).astype(jnp.float32)
    attention_mask = ((1.0 - visible) * -1e9).reshape(B, 1, 1, S)

    # Deterministic synthetic parameters (input-major weights: y = x @ W + b).
    wq = jax.random.normal(ks[1], (H, H), dtype=jnp.float32) * 0.02
    wk = jax.random.normal(ks[2], (H, H), dtype=jnp.float32) * 0.02
    wv = jax.random.normal(ks[3], (H, H), dtype=jnp.float32) * 0.02
    bq = jax.random.normal(ks[4], (H,), dtype=jnp.float32) * 0.02
    bk = jax.random.normal(ks[5], (H,), dtype=jnp.float32) * 0.02
    bv = jax.random.normal(ks[6], (H,), dtype=jnp.float32) * 0.02

    ctx, probs = self_attention(hidden_states, attention_mask,
                                wq, bq, wk, bk, wv, bv, NH)
    jax.block_until_ready((ctx, probs))

    # Pure-JAX reference (same math as the torch forward, f32 HIGHEST).
    def reference(x, mask):
        hi = jax.lax.Precision.HIGHEST
        def proj(w, b):
            y = jnp.matmul(x, w, precision=hi) + b
            return y.reshape(B, S, NH, HD).transpose(0, 2, 1, 3)
        q, k, v = proj(wq, bq), proj(wk, bk), proj(wv, bv)
        s = jnp.einsum('bhqd,bhkd->bhqk', q, k, precision=hi) / math.sqrt(HD)
        s = s + mask
        p = jax.nn.softmax(s, axis=-1)
        c = jnp.einsum('bhqk,bhkd->bhqd', p, v, precision=hi)
        return c.transpose(0, 2, 1, 3).reshape(B, S, H), p

    ctx_exp, probs_exp = reference(hidden_states, attention_mask)

    assert jnp.allclose(ctx, ctx_exp, atol=1e-3, rtol=1e-3), "context mismatch"
    assert jnp.allclose(probs, probs_exp, atol=1e-3, rtol=1e-3), "probs mismatch"

    print("KERNEL_OK")
</pallas_src>

<mosaic_0001>
module attributes {stable_mosaic.version = 11 : i64} {
  func.func @_self_attention_kernel(%arg0: i32, %arg1: memref<1x128x256xf32, #tpu.memory_space<vmem>>, %arg2: memref<256x256xf32, #tpu.memory_space<vmem>>, %arg3: memref<1x256xf32, #tpu.memory_space<vmem>>, %arg4: memref<256x256xf32, #tpu.memory_space<vmem>>, %arg5: memref<1x256xf32, #tpu.memory_space<vmem>>, %arg6: memref<256x256xf32, #tpu.memory_space<vmem>>, %arg7: memref<1x256xf32, #tpu.memory_space<vmem>>, %arg8: memref<1x1x128xf32, #tpu.memory_space<vmem>>, %arg9: memref<1x128x256xf32, #tpu.memory_space<vmem>>, %arg10: memref<1x2x128x128xf32, #tpu.memory_space<vmem>>) attributes {dimension_semantics = [#tpu.dimension_semantics<parallel>], iteration_bounds = array<i64: 2>, scalar_prefetch = 0 : i64, scratch_operands = 0 : i64, tpu.core_type = #tpu.core_type<tc>, window_params = [{transform_indices = @transform_0, window_bounds = array<i64: 1, 128, 256>}, {pipeline_mode = #tpu.pipeline_mode<synchronous>, transform_indices = @transform_1, window_bounds = array<i64: 256, 256>}, {pipeline_mode = #tpu.pipeline_mode<synchronous>, transform_indices = @transform_2, window_bounds = array<i64: 1, 256>}, {pipeline_mode = #tpu.pipeline_mode<synchronous>, transform_indices = @transform_3, window_bounds = array<i64: 256, 256>}, {pipeline_mode = #tpu.pipeline_mode<synchronous>, transform_indices = @transform_4, window_bounds = array<i64: 1, 256>}, {pipeline_mode = #tpu.pipeline_mode<synchronous>, transform_indices = @transform_5, window_bounds = array<i64: 256, 256>}, {pipeline_mode = #tpu.pipeline_mode<synchronous>, transform_indices = @transform_6, window_bounds = array<i64: 1, 256>}, {transform_indices = @transform_7, window_bounds = array<i64: 1, 1, 128>}, {transform_indices = @transform_8, window_bounds = array<i64: 1, 128, 256>}, {transform_indices = @transform_9, window_bounds = array<i64: 1, 2, 128, 128>}]} {
    %c0 = arith.constant 0 : index
    %c0_0 = arith.constant 0 : index
    %c0_1 = arith.constant 0 : index
    %0 = vector.load %arg1[%c0, %c0_0, %c0_1] : memref<1x128x256xf32, #tpu.memory_space<vmem>>, vector<1x128x256xf32>
    %1 = vector.shape_cast %0 : vector<1x128x256xf32> to vector<128x256xf32>
    %2 = arith.truncf %1 : vector<128x256xf32> to vector<128x256xbf16>
    %c0_2 = arith.constant 0 : index
    %c0_3 = arith.constant 0 : index
    %3 = vector.load %arg2[%c0_2, %c0_3] : memref<256x256xf32, #tpu.memory_space<vmem>>, vector<256x256xf32>
    %4 = arith.truncf %3 : vector<256x256xf32> to vector<256x256xbf16>
    %c0_4 = arith.constant 0 : index
    %c0_5 = arith.constant 0 : index
    %5 = vector.load %arg4[%c0_4, %c0_5] : memref<256x256xf32, #tpu.memory_space<vmem>>, vector<256x256xf32>
    %6 = arith.truncf %5 : vector<256x256xf32> to vector<256x256xbf16>
    %c0_6 = arith.constant 0 : index
    %c0_7 = arith.constant 0 : index
    %7 = vector.load %arg6[%c0_6, %c0_7] : memref<256x256xf32, #tpu.memory_space<vmem>>, vector<256x256xf32>
    %8 = arith.truncf %7 : vector<256x256xf32> to vector<256x256xbf16>
    %cst = arith.constant dense<0.000000e+00> : vector<128x256xf32>
    %9 = tpu.matmul %2, %4, %cst {dimension_numbers = #tpu.dot_dimension_numbers<[1], [0], [0], [1], [0, 0, 1, 1], [], []>} : vector<128x256xbf16>, vector<256x256xbf16>, vector<128x256xf32> -> vector<128x256xf32>
    %c0_8 = arith.constant 0 : index
    %c0_9 = arith.constant 0 : index
    %10 = vector.load %arg3[%c0_8, %c0_9] : memref<1x256xf32, #tpu.memory_space<vmem>>, vector<1x256xf32>
    %11 = vector.broadcast %10 : vector<1x256xf32> to vector<128x256xf32>
    %12 = arith.addf %9, %11 : vector<128x256xf32>
    %cst_10 = arith.constant 0.0883883461 : f32
    %13 = vector.broadcast %cst_10 : f32 to vector<128x256xf32>
    %14 = arith.mulf %12, %13 : vector<128x256xf32>
    %cst_11 = arith.constant dense<0.000000e+00> : vector<128x256xf32>
    %15 = tpu.matmul %2, %6, %cst_11 {dimension_numbers = #tpu.dot_dimension_numbers<[1], [0], [0], [1], [0, 0, 1, 1], [], []>} : vector<128x256xbf16>, vector<256x256xbf16>, vector<128x256xf32> -> vector<128x256xf32>
    %c0_12 = arith.constant 0 : index
    %c0_13 = arith.constant 0 : index
    %16 = vector.load %arg5[%c0_12, %c0_13] : memref<1x256xf32, #tpu.memory_space<vmem>>, vector<1x256xf32>
    %17 = vector.broadcast %16 : vector<1x256xf32> to vector<128x256xf32>
    %18 = arith.addf %15, %17 : vector<128x256xf32>
    %cst_14 = arith.constant dense<0.000000e+00> : vector<128x256xf32>
    %19 = tpu.matmul %2, %8, %cst_14 {dimension_numbers = #tpu.dot_dimension_numbers<[1], [0], [0], [1], [0, 0, 1, 1], [], []>} : vector<128x256xbf16>, vector<256x256xbf16>, vector<128x256xf32> -> vector<128x256xf32>
    %c0_15 = arith.constant 0 : index
    %c0_16 = arith.constant 0 : index
    %20 = vector.load %arg7[%c0_15, %c0_16] : memref<1x256xf32, #tpu.memory_space<vmem>>, vector<1x256xf32>
    %21 = vector.broadcast %20 : vector<1x256xf32> to vector<128x256xf32>
    %22 = arith.addf %19, %21 : vector<128x256xf32>
    %23 = arith.truncf %14 : vector<128x256xf32> to vector<128x256xbf16>
    %24 = arith.truncf %18 : vector<128x256xf32> to vector<128x256xbf16>
    %25 = arith.truncf %22 : vector<128x256xf32> to vector<128x256xbf16>
    %c0_17 = arith.constant 0 : index
    %c0_18 = arith.constant 0 : index
    %c0_19 = arith.constant 0 : index
    %26 = vector.load %arg8[%c0_17, %c0_18, %c0_19] : memref<1x1x128xf32, #tpu.memory_space<vmem>>, vector<1x1x128xf32>
    %27 = vector.shape_cast %26 : vector<1x1x128xf32> to vector<1x128xf32>
    %28 = vector.extract_strided_slice %23 {offsets = [0, 0], sizes = [128, 128], strides = [1, 1]} : vector<128x256xbf16> to vector<128x128xbf16>
    %29 = vector.extract_strided_slice %24 {offsets = [0, 0], sizes = [128, 128], strides = [1, 1]} : vector<128x256xbf16> to vector<128x128xbf16>
    %30 = vector.extract_strided_slice %25 {offsets = [0, 0], sizes = [128, 128], strides = [1, 1]} : vector<128x256xbf16> to vector<128x128xbf16>
    %cst_20 = arith.constant dense<0.000000e+00> : vector<128x128xf32>
    %31 = tpu.matmul %28, %29, %cst_20 {dimension_numbers = #tpu.dot_dimension_numbers<[1], [1], [0], [0], [0, 0, 1, 0], [], []>} : vector<128x128xbf16>, vector<128x128xbf16>, vector<128x128xf32> -> vector<128x128xf32>
    %32 = vector.broadcast %27 : vector<1x128xf32> to vector<128x128xf32>
    %33 = arith.addf %31, %32 : vector<128x128xf32>
    %cst_21 = arith.constant dense<0xFF800000> : vector<128xf32>
    %34 = vector.multi_reduction <maximumf>, %33, %cst_21 [1] : vector<128x128xf32> to vector<128xf32>
    %35 = vector.shape_cast %34 : vector<128xf32> to vector<128x1xf32>
    %36 = vector.broadcast %35 : vector<128x1xf32> to vector<128x128xf32>
    %37 = arith.subf %33, %36 : vector<128x128xf32>
    %38 = math.exp %37 : vector<128x128xf32>
    %cst_22 = arith.constant dense<0.000000e+00> : vector<128xf32>
    %39 = vector.multi_reduction <add>, %38, %cst_22 [1] : vector<128x128xf32> to vector<128xf32>
    %40 = vector.shape_cast %39 : vector<128xf32> to vector<128x1xf32>
    %41 = tpu.reciprocal %40 : vector<128x1xf32> -> vector<128x1xf32>
    %42 = vector.broadcast %41 : vector<128x1xf32> to vector<128x128xf32>
    %43 = arith.mulf %38, %42 : vector<128x128xf32>
    %c0_23 = arith.constant 0 : index
    %c0_24 = arith.constant 0 : index
    %c0_25 = arith.constant 0 : index
    %c0_26 = arith.constant 0 : index
    %44 = vector.load %arg10[%c0_23, %c0_24, %c0_25, %c0_26] : memref<1x2x128x128xf32, #tpu.memory_space<vmem>>, vector<1x1x128x128xf32>
    %45 = vector.shape_cast %44 : vector<1x1x128x128xf32> to vector<128x128xf32>
    %46 = vector.shape_cast %43 : vector<128x128xf32> to vector<1x1x128x128xf32>
    tpu.vector_store %arg10[%c0_23, %c0_24, %c0_25, %c0_26], %46 {strides = array<i32>} : memref<1x2x128x128xf32, #tpu.memory_space<vmem>>, vector<1x1x128x128xf32>,
    %47 = arith.truncf %43 : vector<128x128xf32> to vector<128x128xbf16>
    %cst_27 = arith.constant dense<0.000000e+00> : vector<128x128xf32>
    %48 = tpu.matmul %47, %30, %cst_27 {dimension_numbers = #tpu.dot_dimension_numbers<[1], [0], [0], [1], [0, 0, 1, 1], [], []>} : vector<128x128xbf16>, vector<128x128xbf16>, vector<128x128xf32> -> vector<128x128xf32>
    %49 = vector.extract_strided_slice %23 {offsets = [0, 128], sizes = [128, 128], strides = [1, 1]} : vector<128x256xbf16> to vector<128x128xbf16>
    %50 = vector.extract_strided_slice %24 {offsets = [0, 128], sizes = [128, 128], strides = [1, 1]} : vector<128x256xbf16> to vector<128x128xbf16>
    %51 = vector.extract_strided_slice %25 {offsets = [0, 128], sizes = [128, 128], strides = [1, 1]} : vector<128x256xbf16> to vector<128x128xbf16>
    %cst_28 = arith.constant dense<0.000000e+00> : vector<128x128xf32>
    %52 = tpu.matmul %49, %50, %cst_28 {dimension_numbers = #tpu.dot_dimension_numbers<[1], [1], [0], [0], [0, 0, 1, 0], [], []>} : vector<128x128xbf16>, vector<128x128xbf16>, vector<128x128xf32> -> vector<128x128xf32>
    %53 = vector.broadcast %27 : vector<1x128xf32> to vector<128x128xf32>
    %54 = arith.addf %52, %53 : vector<128x128xf32>
    %cst_29 = arith.constant dense<0xFF800000> : vector<128xf32>
    %55 = vector.multi_reduction <maximumf>, %54, %cst_29 [1] : vector<128x128xf32> to vector<128xf32>
    %56 = vector.shape_cast %55 : vector<128xf32> to vector<128x1xf32>
    %57 = vector.broadcast %56 : vector<128x1xf32> to vector<128x128xf32>
    %58 = arith.subf %54, %57 : vector<128x128xf32>
    %59 = math.exp %58 : vector<128x128xf32>
    %cst_30 = arith.constant dense<0.000000e+00> : vector<128xf32>
    %60 = vector.multi_reduction <add>, %59, %cst_30 [1] : vector<128x128xf32> to vector<128xf32>
    %61 = vector.shape_cast %60 : vector<128xf32> to vector<128x1xf32>
    %62 = tpu.reciprocal %61 : vector<128x1xf32> -> vector<128x1xf32>
    %63 = vector.broadcast %62 : vector<128x1xf32> to vector<128x128xf32>
    %64 = arith.mulf %59, %63 : vector<128x128xf32>
    %c0_31 = arith.constant 0 : index
    %c1 = arith.constant 1 : index
    %c0_32 = arith.constant 0 : index
    %c0_33 = arith.constant 0 : index
    %65 = vector.load %arg10[%c0_31, %c1, %c0_32, %c0_33] : memref<1x2x128x128xf32, #tpu.memory_space<vmem>>, vector<1x1x128x128xf32>
    %66 = vector.shape_cast %65 : vector<1x1x128x128xf32> to vector<128x128xf32>
    %67 = vector.shape_cast %64 : vector<128x128xf32> to vector<1x1x128x128xf32>
    tpu.vector_store %arg10[%c0_31, %c1, %c0_32, %c0_33], %67 {strides = array<i32>} : memref<1x2x128x128xf32, #tpu.memory_space<vmem>>, vector<1x1x128x128xf32>,
    %68 = arith.truncf %64 : vector<128x128xf32> to vector<128x128xbf16>
    %cst_34 = arith.constant dense<0.000000e+00> : vector<128x128xf32>
    %69 = tpu.matmul %68, %51, %cst_34 {dimension_numbers = #tpu.dot_dimension_numbers<[1], [0], [0], [1], [0, 0, 1, 1], [], []>} : vector<128x128xbf16>, vector<128x128xbf16>, vector<128x128xf32> -> vector<128x128xf32>
    %70 = tpu.concatenate %48, %69 in 1 : vector<128x128xf32>, vector<128x128xf32> -> vector<128x256xf32>
    %c0_35 = arith.constant 0 : index
    %c0_36 = arith.constant 0 : index
    %c0_37 = arith.constant 0 : index
    %71 = vector.load %arg9[%c0_35, %c0_36, %c0_37] : memref<1x128x256xf32, #tpu.memory_space<vmem>>, vector<1x128x256xf32>
    %72 = vector.shape_cast %71 : vector<1x128x256xf32> to vector<128x256xf32>
    %73 = vector.shape_cast %70 : vector<128x256xf32> to vector<1x128x256xf32>
    tpu.vector_store %arg9[%c0_35, %c0_36, %c0_37], %73 {strides = array<i32>} : memref<1x128x256xf32, #tpu.memory_space<vmem>>, vector<1x128x256xf32>,
    return
  }
  func.func @transform_0(%arg0: i32) -> (i32, i32, i32) {
    %c0_i32 = arith.constant 0 : i32
    %c0_i32_0 = arith.constant 0 : i32
    %c0_i32_1 = arith.constant 0 : i32
    return %arg0, %c0_i32, %c0_i32_0 : i32, i32, i32
  }
  func.func @transform_1(%arg0: i32) -> (i32, i32) {
    %c0_i32 = arith.constant 0 : i32
    %c0_i32_0 = arith.constant 0 : i32
    %c0_i32_1 = arith.constant 0 : i32
    return %c0_i32, %c0_i32_0 : i32, i32
  }
  func.func @transform_2(%arg0: i32) -> (i32, i32) {
    %c0_i32 = arith.constant 0 : i32
    %c0_i32_0 = arith.constant 0 : i32
    %c0_i32_1 = arith.constant 0 : i32
    return %c0_i32, %c0_i32_0 : i32, i32
  }
  func.func @transform_3(%arg0: i32) -> (i32, i32) {
    %c0_i32 = arith.constant 0 : i32
    %c0_i32_0 = arith.constant 0 : i32
    %c0_i32_1 = arith.constant 0 : i32
    return %c0_i32, %c0_i32_0 : i32, i32
  }
  func.func @transform_4(%arg0: i32) -> (i32, i32) {
    %c0_i32 = arith.constant 0 : i32
    %c0_i32_0 = arith.constant 0 : i32
    %c0_i32_1 = arith.constant 0 : i32
    return %c0_i32, %c0_i32_0 : i32, i32
  }
  func.func @transform_5(%arg0: i32) -> (i32, i32) {
    %c0_i32 = arith.constant 0 : i32
    %c0_i32_0 = arith.constant 0 : i32
    %c0_i32_1 = arith.constant 0 : i32
    return %c0_i32, %c0_i32_0 : i32, i32
  }
  func.func @transform_6(%arg0: i32) -> (i32, i32) {
    %c0_i32 = arith.constant 0 : i32
    %c0_i32_0 = arith.constant 0 : i32
    %c0_i32_1 = arith.constant 0 : i32
    return %c0_i32, %c0_i32_0 : i32, i32
  }
  func.func @transform_7(%arg0: i32) -> (i32, i32, i32) {
    %c0_i32 = arith.constant 0 : i32
    %c0_i32_0 = arith.constant 0 : i32
    %c0_i32_1 = arith.constant 0 : i32
    return %arg0, %c0_i32, %c0_i32_0 : i32, i32, i32
  }
  func.func @transform_8(%arg0: i32) -> (i32, i32, i32) {
    %c0_i32 = arith.constant 0 : i32
    %c0_i32_0 = arith.constant 0 : i32
    %c0_i32_1 = arith.constant 0 : i32
    return %arg0, %c0_i32, %c0_i32_0 : i32, i32, i32
  }
  func.func @transform_9(%arg0: i32) -> (i32, i32, i32, i32) {
    %c0_i32 = arith.constant 0 : i32
    %c0_i32_0 = arith.constant 0 : i32
    %c0_i32_1 = arith.constant 0 : i32
    %c0_i32_2 = arith.constant 0 : i32
    return %arg0, %c0_i32, %c0_i32_0, %c0_i32_1 : i32, i32, i32, i32
  }
}

</mosaic_0001>

<llo_original>
// kernel: tpu_custom_call.1
$region0: #{tpu_custom_call.1}
  #allocation0 [shape = 'u32[]', space=smem, size = 0x4, offset = 0x4, fixed_abs, tag = 'smem constant byte address 0x4 - core index']
  #allocation1 [shape = 'u32[144,128]{1,0:T(1,128)}', space=vmem, size = 0x12000, scoped, tag = 'internal scratch']
  %s0 = inlined_call_operand.hbm [shape: f32[2,128,256], index: 0, kind: input, shape index: {}]
  %s1 = inlined_call_operand.hbm [shape: f32[256,256], index: 1, kind: input, shape index: {}]
  %s2 = inlined_call_operand.vmem [shape: f32[1,256], index: 2, kind: input, shape index: {}]
  %s3 = inlined_call_operand.hbm [shape: f32[256,256], index: 3, kind: input, shape index: {}]
  %s4 = inlined_call_operand.vmem [shape: f32[1,256], index: 4, kind: input, shape index: {}]
  %s5 = inlined_call_operand.hbm [shape: f32[256,256], index: 5, kind: input, shape index: {}]
  %s6 = inlined_call_operand.vmem [shape: f32[1,256], index: 6, kind: input, shape index: {}]
  %s7 = inlined_call_operand.vmem [shape: f32[2,1,128], index: 7, kind: input, shape index: {}]
  %s8 = inlined_call_operand.hbm [shape: f32[2,128,256], index: 8, kind: output, shape index: {0}]
  %s9 = inlined_call_operand.hbm [shape: f32[2,2,128,128], index: 9, kind: output, shape index: {1}]
  %10 = xla_tuple %s8, %s9
  %s11 = sld [smem:[#allocation0]]
  $region89: #{tpu_custom_call.1} parent=0
    _
  %s13 = ssub.s32 1, %s11
  %s14 = scalar_select 0, %s13, %s11
  $region1: #{tpu_custom_call.1} parent=0
    #allocation2 [shape = 'u8[262144]{0}', space=vmem, size = 0x40000, scoped, tag = 'input window, operand 0']
    #allocation3 [shape = 's32[2]{0}', space=sflag, size = 0x8, scoped, tag = 'scoped memory for tpu_custom_call.1']
    #allocation4 [shape = 's32[2]{0}', space=sflag, size = 0x8, scoped, tag = 'scoped memory for tpu_custom_call.1']
    #allocation5 [shape = 'u8[262144]{0}', space=vmem, size = 0x40000, scoped, tag = 'input window, operand 1, single buffered']
    #allocation6 [shape = 's32[1]{0}', space=sflag, size = 0x4, scoped, tag = 'scoped memory for tpu_custom_call.1']
    #allocation7 [shape = 'u8[262144]{0}', space=vmem, size = 0x40000, scoped, tag = 'input window, operand 3, single buffered']
    #allocation8 [shape = 'u8[262144]{0}', space=vmem, size = 0x40000, scoped, tag = 'input window, operand 5, single buffered']
    #allocation9 [shape = 's32[1]{0}', space=sflag, size = 0x4, scoped, tag = 'scoped memory for tpu_custom_call.1']
    #allocation10 [shape = 'u8[262144]{0}', space=vmem, size = 0x40000, scoped, tag = 'output window, operand 0']
    #allocation11 [shape = 'u8[262144]{0}', space=vmem, size = 0x40000, scoped, tag = 'output window, operand 1']
    #allocation12 [shape = 's32[2]{0}', space=sflag, size = 0x8, scoped, tag = 'scoped memory for tpu_custom_call.1']
    %15 = vsyncpa [#allocation3], 0
    %s16 = scalar_lea.sflag [#allocation3], 1
    %17 = vsyncpa %s16, 0
    %18 = vsyncpa [#allocation6], 0
    %19 = vsyncpa [#allocation9], 0
    %20 = vsyncpa [#allocation4], 0
    %s21 = scalar_lea.sflag [#allocation4], 1
    %22 = vsyncpa %s21, 0
    %23 = vsyncpa [#allocation12], 0
    %s24 = scalar_lea.sflag [#allocation12], 1
    %25 = vsyncpa %s24, 0
    loop: start=0, step=1, limit=4
    $region2: #{tpu_custom_call.1} parent=1 // loop_pre_header
      _
    $region3: #{tpu_custom_call.1} parent=1 // loop_header
      %s27 = sphi 0, %s31
      %p28 = scmp.ge.s32.totalorder %s27, 4
      %s37 = sphi 0, %s39
      %s40 = sphi 0, %s37
      %s41 = sphi 0, %s40
      %s57 = sphi 0, %s41
      %s61 = sphi 0, %s61
      %s63 = sphi 0, %s61
      %s64 = sphi 0, %s63
      %s78 = sphi 0, %s64
      %s82 = sphi 0, %s82
      %s84 = sphi 0, %s82
      %s85 = sphi 0, %s84
      %s99 = sphi 0, %s85
      %s103 = sphi 0, %s103
      %s105 = sphi 0, %s103
      %s106 = sphi 0, %s105
      %s120 = sphi 0, %s106
      %s124 = sphi 0, %s124
      %s126 = sphi 0, %s124
      %s127 = sphi 0, %s126
      %s141 = sphi 0, %s127
      %s145 = sphi 0, %s145
      %s147 = sphi 0, %s145
      %s148 = sphi 0, %s147
      %s162 = sphi 0, %s148
      %s166 = sphi 0, %s166
      %s168 = sphi 0, %s166
      %s169 = sphi 0, %s168
      %s183 = sphi 0, %s169
      %s189 = sphi 0, %s191
      %s192 = sphi 0, %s189
      %s193 = sphi 0, %s192
      %s209 = sphi 0, %s193
      %s215 = sphi 0, %s217
      %s218 = sphi 0, %s215
      %s219 = sphi 0, %s218
      %s235 = sphi 0, %s219
      %s241 = sphi 0, %s243
      %s244 = sphi 0, %s241
      %s245 = sphi 0, %s244
      %s261 = sphi 0, %s245
    $region4: #{tpu_custom_call.1} parent=1 // loop_header_branch
      %30 = sbr.rel (%p28) target = $region8
    $region5: #{tpu_custom_call.1} parent=1 // loop_body
      %s32 = ssub.s32 %s27, 1
      %s33 = ssub.s32 %s27, 2
      %s34 = sadd.s32 %s27, 1
      %s35 = ssub.s32 %s27, %s34
      %p36 = scmp.eq.s32.totalorder %s35, 0
      %s38 = sadd.s32 %s37, 1
      %s39 = scalar_select %p36, %s37, %s38
      %p42 = pneg %p36
      %p43 = scmp.eq.s32.totalorder %s27, 1
      %p44 = por %p42, %p43
      %p45 = scmp.ne.s32.totalorder %s37, %s40
      %p46 = scmp.eq.s32.totalorder %s27, 0
      %p47 = por %p45, %p46
      %p48 = scmp.ne.s32.totalorder %s37, %s40
      %p49 = scmp.eq.s32.totalorder %s32, 1
      %p50 = por %p48, %p49
      %p51 = scmp.ne.s32.totalorder %s40, %s41
      %p52 = scmp.eq.s32.totalorder %s32, 0
      %p53 = por %p51, %p52
      %p54 = scmp.ne.s32.totalorder %s40, %s41
      %p55 = scmp.eq.s32.totalorder %s33, 1
      %p56 = por %p54, %p55
      %p58 = scmp.ne.s32.totalorder %s41, %s57
      %p59 = scmp.eq.s32.totalorder %s33, 0
      %p60 = por %p58, %p59
      %s62 = sadd.s32 %s61, 1
      %p65 = scmp.eq.s32.totalorder %s27, 1
      %p66 = scmp.ne.s32.totalorder %s61, %s63
      %p67 = scmp.eq.s32.totalorder %s27, 0
      %p68 = por %p66, %p67
      %p69 = scmp.ne.s32.totalorder %s61, %s63
      %p70 = scmp.eq.s32.totalorder %s32, 1
      %p71 = por %p69, %p70
      %p72 = scmp.ne.s32.totalorder %s63, %s64
      %p73 = scmp.eq.s32.totalorder %s32, 0
      %p74 = por %p72, %p73
      %p75 = scmp.ne.s32.totalorder %s63, %s64
      %p76 = scmp.eq.s32.totalorder %s33, 1
      %p77 = por %p75, %p76
      %p79 = scmp.ne.s32.totalorder %s64, %s78
      %p80 = scmp.eq.s32.totalorder %s33, 0
      %p81 = por %p79, %p80
      %s83 = sadd.s32 %s82, 1
      %p86 = scmp.eq.s32.totalorder %s27, 1
      %p87 = scmp.ne.s32.totalorder %s82, %s84
      %p88 = scmp.eq.s32.totalorder %s27, 0
      %p89 = por %p87, %p88
      %p90 = scmp.ne.s32.totalorder %s82, %s84
      %p91 = scmp.eq.s32.totalorder %s32, 1
      %p92 = por %p90, %p91
      %p93 = scmp.ne.s32.totalorder %s84, %s85
      %p94 = scmp.eq.s32.totalorder %s32, 0
      %p95 = por %p93, %p94
      %p96 = scmp.ne.s32.totalorder %s84, %s85
      %p97 = scmp.eq.s32.totalorder %s33, 1
      %p98 = por %p96, %p97
      %p100 = scmp.ne.s32.totalorder %s85, %s99
      %p101 = scmp.eq.s32.totalorder %s33, 0
      %p102 = por %p100, %p101
      %s104 = sadd.s32 %s103, 1
      %p107 = scmp.eq.s32.totalorder %s27, 1
      %p108 = scmp.ne.s32.totalorder %s103, %s105
      %p109 = scmp.eq.s32.totalorder %s27, 0
      %p110 = por %p108, %p109
      %p111 = scmp.ne.s32.totalorder %s103, %s105
      %p112 = scmp.eq.s32.totalorder %s32, 1
      %p113 = por %p111, %p112
      %p114 = scmp.ne.s32.totalorder %s105, %s106
      %p115 = scmp.eq.s32.totalorder %s32, 0
      %p116 = por %p114, %p115
      %p117 = scmp.ne.s32.totalorder %s105, %s106
      %p118 = scmp.eq.s32.totalorder %s33, 1
      %p119 = por %p117, %p118
      %p121 = scmp.ne.s32.totalorder %s106, %s120
      %p122 = scmp.eq.s32.totalorder %s33, 0
      %p123 = por %p121, %p122
      %s125 = sadd.s32 %s124, 1
      %p128 = scmp.eq.s32.totalorder %s27, 1
      %p129 = scmp.ne.s32.totalorder %s124, %s126
      %p130 = scmp.eq.s32.totalorder %s27, 0
      %p131 = por %p129, %p130
      %p132 = scmp.ne.s32.totalorder %s124, %s126
      %p133 = scmp.eq.s32.totalorder %s32, 1
      %p134 = por %p132, %p133
      %p135 = scmp.ne.s32.totalorder %s126, %s127
      %p136 = scmp.eq.s32.totalorder %s32, 0
      %p137 = por %p135, %p136
      %p138 = scmp.ne.s32.totalorder %s126, %s127
      %p139 = scmp.eq.s32.totalorder %s33, 1
      %p140 = por %p138, %p139
      %p142 = scmp.ne.s32.totalorder %s127, %s141
      %p143 = scmp.eq.s32.totalorder %s33, 0
      %p144 = por %p142, %p143
      %s146 = sadd.s32 %s145, 1
      %p149 = scmp.eq.s32.totalorder %s27, 1
      %p150 = scmp.ne.s32.totalorder %s145, %s147
      %p151 = scmp.eq.s32.totalorder %s27, 0
      %p152 = por %p150, %p151
      %p153 = scmp.ne.s32.totalorder %s145, %s147
      %p154 = scmp.eq.s32.totalorder %s32, 1
      %p155 = por %p153, %p154
      %p156 = scmp.ne.s32.totalorder %s147, %s148
      %p157 = scmp.eq.s32.totalorder %s32, 0
      %p158 = por %p156, %p157
      %p159 = scmp.ne.s32.totalorder %s147, %s148
      %p160 = scmp.eq.s32.totalorder %s33, 1
      %p161 = por %p159, %p160
      %p163 = scmp.ne.s32.totalorder %s148, %s162
      %p164 = scmp.eq.s32.totalorder %s33, 0
      %p165 = por %p163, %p164
      %s167 = sadd.s32 %s166, 1
      %p170 = scmp.eq.s32.totalorder %s27, 1
      %p171 = scmp.ne.s32.totalorder %s166, %s168
      %p172 = scmp.eq.s32.totalorder %s27, 0
      %p173 = por %p171, %p172
      %p174 = scmp.ne.s32.totalorder %s166, %s168
      %p175 = scmp.eq.s32.totalorder %s32, 1
      %p176 = por %p174, %p175
      %p177 = scmp.ne.s32.totalorder %s168, %s169
      %p178 = scmp.eq.s32.totalorder %s32, 0
      %p179 = por %p177, %p178
      %p180 = scmp.ne.s32.totalorder %s168, %s169
      %p181 = scmp.eq.s32.totalorder %s33, 1
      %p182 = por %p180, %p181
      %p184 = scmp.ne.s32.totalorder %s169, %s183
      %p185 = scmp.eq.s32.totalorder %s33, 0
      %p186 = por %p184, %p185
      %s187 = ssub.s32 %s27, %s34
      %p188 = scmp.eq.s32.totalorder %s187, 0
      %s190 = sadd.s32 %s189, 1
      %s191 = scalar_select %p188, %s189, %s190
      %p194 = pneg %p188
      %p195 = scmp.eq.s32.totalorder %s27, 1
      %p196 = por %p194, %p195
      %p197 = scmp.ne.s32.totalorder %s189, %s192
      %p198 = scmp.eq.s32.totalorder %s27, 0
      %p199 = por %p197, %p198
      %p200 = scmp.ne.s32.totalorder %s189, %s192
      %p201 = scmp.eq.s32.totalorder %s32, 1
      %p202 = por %p200, %p201
      %p203 = scmp.ne.s32.totalorder %s192, %s193
      %p204 = scmp.eq.s32.totalorder %s32, 0
      %p205 = por %p203, %p204
      %p206 = scmp.ne.s32.totalorder %s192, %s193
      %p207 = scmp.eq.s32.totalorder %s33, 1
      %p208 = por %p206, %p207
      %p210 = scmp.ne.s32.totalorder %s193, %s209
      %p211 = scmp.eq.s32.totalorder %s33, 0
      %p212 = por %p210, %p211
      %s213 = ssub.s32 %s27, %s34
      %p214 = scmp.eq.s32.totalorder %s213, 0
      %s216 = sadd.s32 %s215, 1
      %s217 = scalar_select %p214, %s215, %s216
      %p220 = pneg %p214
      %p221 = scmp.eq.s32.totalorder %s27, 1
      %p222 = por %p220, %p221
      %p223 = scmp.ne.s32.totalorder %s215, %s218
      %p224 = scmp.eq.s32.totalorder %s27, 0
      %p225 = por %p223, %p224
      %p226 = scmp.ne.s32.totalorder %s215, %s218
      %p227 = scmp.eq.s32.totalorder %s32, 1
      %p228 = por %p226, %p227
      %p229 = scmp.ne.s32.totalorder %s218, %s219
      %p230 = scmp.eq.s32.totalorder %s32, 0
      %p231 = por %p229, %p230
      %p232 = scmp.ne.s32.totalorder %s218, %s219
      %p233 = scmp.eq.s32.totalorder %s33, 1
      %p234 = por %p232, %p233
      %p236 = scmp.ne.s32.totalorder %s219, %s235
      %p237 = scmp.eq.s32.totalorder %s33, 0
      %p238 = por %p236, %p237
      %s239 = ssub.s32 %s27, %s34
      %p240 = scmp.eq.s32.totalorder %s239, 0
      %s242 = sadd.s32 %s241, 1
      %s243 = scalar_select %p240, %s241, %s242
      %p246 = pneg %p240
      %p247 = scmp.eq.s32.totalorder %s27, 1
      %p248 = por %p246, %p247
      %p249 = scmp.ne.s32.totalorder %s241, %s244
      %p250 = scmp.eq.s32.totalorder %s27, 0
      %p251 = por %p249, %p250
      %p252 = scmp.ne.s32.totalorder %s241, %s244
      %p253 = scmp.eq.s32.totalorder %s32, 1
      %p254 = por %p252, %p253
      %p255 = scmp.ne.s32.totalorder %s244, %s245
      %p256 = scmp.eq.s32.totalorder %s32, 0
      %p257 = por %p255, %p256
      %p258 = scmp.ne.s32.totalorder %s244, %s245
      %p259 = scmp.eq.s32.totalorder %s33, 1
      %p260 = por %p258, %p259
      %p262 = scmp.ne.s32.totalorder %s245, %s261
      %p263 = scmp.eq.s32.totalorder %s33, 0
      %p264 = por %p262, %p263
      %p265 = scmp.le.s32.totalorder 1, %s27
      %p266 = scmp.lt.s32.totalorder %s27, 3
      %p267 = pnand %p265, %p266
      %p268 = pneg %p267
      // Predicated region
      $region9: #{tpu_custom_call.1} parent=5 // pred_check
        _
      $region10: #{tpu_custom_call.1} parent=5 // pred_check_branch
        %270 = sbr.rel (%p267) target = $region12
      $region11: #{tpu_custom_call.1} parent=5 // pred_region
        %s271 = ssub.s32 %s27, 1
        // Predicated region
        $region13: #{tpu_custom_call.1} parent=11 // pred_check
          %p272 = pneg %p74
        $region14: #{tpu_custom_call.1} parent=11 // pred_check_branch
          %274 = sbr.rel (%p272) target = $region16
        $region15: #{tpu_custom_call.1} parent=11 // pred_region
          %s276 = ssub.s32 8192, 8192
          %277 = vsyncadd [#allocation6], %s276
          %s278 = sshll.u32 [#allocation5], 4
          %s279 = int_to_ptr.vmem [resolvable:$true] %s278
          %284 = dma.hbm_to_vmem [thread:$0]  %s1, 8192, %s279, [#allocation6], 256, 256, 16
        $region16: #{tpu_custom_call.1} parent=11 // pred_fallthru
          _
        // Predicated region
        $region17: #{tpu_custom_call.1} parent=11 // pred_check
          %p285 = pneg %p95
        $region18: #{tpu_custom_call.1} parent=11 // pred_check_branch
          %287 = sbr.rel (%p285) target = $region20
        $region19: #{tpu_custom_call.1} parent=11 // pred_region
          _
        $region20: #{tpu_custom_call.1} parent=11 // pred_fallthru
          _
        // Predicated region
        $region21: #{tpu_custom_call.1} parent=11 // pred_check
          %p288 = pneg %p116
        $region22: #{tpu_custom_call.1} parent=11 // pred_check_branch
          %290 = sbr.rel (%p288) target = $region24
        $region23: #{tpu_custom_call.1} parent=11 // pred_region
          %s292 = ssub.s32 8192, 8192
          %293 = vsyncadd [#allocation6], %s292
          %s294 = sshll.u32 [#allocation7], 4
          %s295 = int_to_ptr.vmem [resolvable:$true] %s294
          %300 = dma.hbm_to_vmem [thread:$0]  %s3, 8192, %s295, [#allocation6], 256, 256, 16
        $region24: #{tpu_custom_call.1} parent=11 // pred_fallthru
          _
        // Predicated region
        $region25: #{tpu_custom_call.1} parent=11 // pred_check
          %p301 = pneg %p137
        $region26: #{tpu_custom_call.1} parent=11 // pred_check_branch
          %303 = sbr.rel (%p301) target = $region28
        $region27: #{tpu_custom_call.1} parent=11 // pred_region
          _
        $region28: #{tpu_custom_call.1} parent=11 // pred_fallthru
          _
        // Predicated region
        $region29: #{tpu_custom_call.1} parent=11 // pred_check
          %p304 = pneg %p158
        $region30: #{tpu_custom_call.1} parent=11 // pred_check_branch
          %306 = sbr.rel (%p304) target = $region32
        $region31: #{tpu_custom_call.1} parent=11 // pred_region
          %s308 = ssub.s32 8192, 8192
          %309 = vsyncadd [#allocation9], %s308
          %s310 = sshll.u32 [#allocation8], 4
          %s311 = int_to_ptr.vmem [resolvable:$true] %s310
          %316 = dma.hbm_to_vmem [thread:$0]  %s5, 8192, %s311, [#allocation9], 256, 256, 16
        $region32: #{tpu_custom_call.1} parent=11 // pred_fallthru
          _
        // Predicated region
        $region33: #{tpu_custom_call.1} parent=11 // pred_check
          %p317 = pneg %p179
        $region34: #{tpu_custom_call.1} parent=11 // pred_check_branch
          %319 = sbr.rel (%p317) target = $region36
        $region35: #{tpu_custom_call.1} parent=11 // pred_region
          _
        $region36: #{tpu_custom_call.1} parent=11 // pred_fallthru
          _
      $region12: #{tpu_custom_call.1} parent=5 // pred_fallthru
        _
      %p320 = scmp.lt.s32.totalorder %s27, 2
      // Predicated region
      $region37: #{tpu_custom_call.1} parent=5 // pred_check
        %p321 = pneg %p320
      $region38: #{tpu_custom_call.1} parent=5 // pred_check_branch
        %323 = sbr.rel (%p321) target = $region40
      $region39: #{tpu_custom_call.1} parent=5 // pred_region
        // Predicated region
        $region41: #{tpu_custom_call.1} parent=39 // pred_check
          %p324 = pneg %p47
        $region42: #{tpu_custom_call.1} parent=39 // pred_check_branch
          %326 = sbr.rel (%p324) target = $region44
        $region43: #{tpu_custom_call.1} parent=39 // pred_region
          %s327 = sand.u32 %s37, 1
          %s328 = scalar_lea.sflag [#allocation3], %s327
          %s329 = sand.u32 %s37, 1
          %s330 = smul.addr %s329, 256
          %s331 = scalar_lea.vmem [#allocation2], %s330
          %s333 = ssub.s32 4096, 4096
          %334 = vsyncadd %s328, %s333
          %s335 = smul.addr %s27, 32
          %s336 = smul.addr %s335, 128
          %s337 = scalar_lea.hbm %s0, %s336
          %s338 = sshll.u32 %s331, 4
          %s339 = int_to_ptr.vmem [resolvable:$true] %s338
          %344 = dma.hbm_to_vmem [thread:$0]  %s337, 4096, %s339, %s328, 256, 256, 16
        $region44: #{tpu_custom_call.1} parent=39 // pred_fallthru
          _
        // Predicated region
        $region45: #{tpu_custom_call.1} parent=39 // pred_check
          %p345 = pneg %p199
        $region46: #{tpu_custom_call.1} parent=39 // pred_check_branch
          %347 = sbr.rel (%p345) target = $region48
        $region47: #{tpu_custom_call.1} parent=39 // pred_region
          %p348 = scmp.lt.s32.totalorder %s27, 1
          %s349 = scalar_select %p348, %s27, 1
          %s350 = scalar_lea.vmem %s7, %s349
        $region48: #{tpu_custom_call.1} parent=39 // pred_fallthru
          _
      $region40: #{tpu_custom_call.1} parent=5 // pred_fallthru
        _
      %p351 = scmp.le.s32.totalorder 1, %s27
      %p352 = scmp.lt.s32.totalorder %s27, 3
      %p353 = pnand %p351, %p352
      %p354 = pneg %p353
      // Predicated region
      $region49: #{tpu_custom_call.1} parent=5 // pred_check
        _
      $region50: #{tpu_custom_call.1} parent=5 // pred_check_branch
        %356 = sbr.rel (%p353) target = $region52
      $region51: #{tpu_custom_call.1} parent=5 // pred_region
        %s357 = ssub.s32 %s27, 1
        %s358 = sand.u32 %s40, 1
        %s359 = scalar_lea.sflag [#allocation3], %s358
        %s360 = sand.u32 %s40, 1
        %s361 = smul.addr %s360, 256
        %s362 = scalar_lea.vmem [#allocation2], %s361
        // Predicated region
        $region53: #{tpu_custom_call.1} parent=51 // pred_check
          %p363 = pneg %p53
        $region54: #{tpu_custom_call.1} parent=51 // pred_check_branch
          %365 = sbr.rel (%p363) target = $region56
        $region55: #{tpu_custom_call.1} parent=51 // pred_region
          %366 = dma.done %s359, 4096
        $region56: #{tpu_custom_call.1} parent=51 // pred_fallthru
          _
        // Predicated region
        $region57: #{tpu_custom_call.1} parent=51 // pred_check
          %p367 = pneg %p74
        $region58: #{tpu_custom_call.1} parent=51 // pred_check_branch
          %369 = sbr.rel (%p367) target = $region60
        $region59: #{tpu_custom_call.1} parent=51 // pred_region
          %370 = dma.done [#allocation6], 8192
        $region60: #{tpu_custom_call.1} parent=51 // pred_fallthru
          _
        // Predicated region
        $region61: #{tpu_custom_call.1} parent=51 // pred_check
          %p371 = pneg %p116
        $region62: #{tpu_custom_call.1} parent=51 // pred_check_branch
          %373 = sbr.rel (%p371) target = $region64
        $region63: #{tpu_custom_call.1} parent=51 // pred_region
          %374 = dma.done [#allocation6], 8192
        $region64: #{tpu_custom_call.1} parent=51 // pred_fallthru
          _
        // Predicated region
        $region65: #{tpu_custom_call.1} parent=51 // pred_check
          %p375 = pneg %p158
        $region66: #{tpu_custom_call.1} parent=51 // pred_check_branch
          %377 = sbr.rel (%p375) target = $region68
        $region67: #{tpu_custom_call.1} parent=51 // pred_region
          %378 = dma.done [#allocation9], 8192
        $region68: #{tpu_custom_call.1} parent=51 // pred_fallthru
          _
        %s379 = sand.u32 %s40, 1
        %s380 = scalar_lea.sflag [#allocation3], %s379
        %s381 = sand.u32 %s40, 1
        %s382 = smul.addr %s381, 256
        %s383 = scalar_lea.vmem [#allocation2], %s382
        %p384 = pneg %p53
        %p385 = pneg %p50
        %p386 = pneg %p74
        %p387 = pneg %p71
        %p388 = pneg %p95
        %p389 = pneg %p92
        %p390 = pneg %p116
        %p391 = pneg %p113
        %p392 = pneg %p137
        %p393 = pneg %p134
        %p394 = pneg %p158
        %p395 = pneg %p155
        %p396 = pneg %p179
        %p397 = pneg %p176
        %p398 = scmp.lt.s32.totalorder %s32, 1
        %s399 = scalar_select %p398, %s32, 1
        %s400 = scalar_lea.vmem %s7, %s399
        %p401 = pneg %p205
        %p402 = pneg %p202
        %p403 = pneg %p231
        %p404 = pneg %p228
        %s405 = sand.u32 %s218, 1
        %s406 = scalar_lea.sflag [#allocation4], %s405
        %s407 = sand.u32 %s218, 1
        %s408 = smul.addr %s407, 256
        %s409 = scalar_lea.vmem [#allocation10], %s408
        %p410 = pneg %p257
        %p411 = pneg %p254
        %s412 = sand.u32 %s244, 1
        %s413 = scalar_lea.sflag [#allocation12], %s412
        %s414 = sand.u32 %s244, 1
        %s415 = smul.addr %s414, 256
        %s416 = scalar_lea.vmem [#allocation11], %s415
        %p417 = scmp.lt.s32.totalorder %s32, 1
        %s418 = scalar_select %p417, %s32, 1
        %s419 = scalar_lea.vmem %s7, %s418
        %v421 = vld [vmem:[%s362] sm:$0xff]
        %v422 = vld [vmem:[%s362 + $0x8] sm:$0xff]
        %v423 = vld [vmem:[%s362 + $0x10] sm:$0xff]
        %v424 = vld [vmem:[%s362 + $0x18] sm:$0xff]
        %v425 = vld [vmem:[%s362 + $0x20] sm:$0xff]
        %v426 = vld [vmem:[%s362 + $0x28] sm:$0xff]
        %v427 = vld [vmem:[%s362 + $0x30] sm:$0xff]
        %v428 = vld [vmem:[%s362 + $0x38] sm:$0xff]
        %v429 = vld [vmem:[%s362 + $0x40] sm:$0xff]
        %v430 = vld [vmem:[%s362 + $0x48] sm:$0xff]
        %v431 = vld [vmem:[%s362 + $0x50] sm:$0xff]
        %v432 = vld [vmem:[%s362 + $0x58] sm:$0xff]
        %v433 = vld [vmem:[%s362 + $0x60] sm:$0xff]
        %v434 = vld [vmem:[%s362 + $0x68] sm:$0xff]
        %v435 = vld [vmem:[%s362 + $0x70] sm:$0xff]
        %v436 = vld [vmem:[%s362 + $0x78] sm:$0xff]
        %v437 = vld [vmem:[%s362 + $0x80] sm:$0xff]
        %v438 = vld [vmem:[%s362 + $0x88] sm:$0xff]
        %v439 = vld [vmem:[%s362 + $0x90] sm:$0xff]
        %v440 = vld [vmem:[%s362 + $0x98] sm:$0xff]
        %v441 = vld [vmem:[%s362 + $0xa0] sm:$0xff]
        %v442 = vld [vmem:[%s362 + $0xa8] sm:$0xff]
        %v443 = vld [vmem:[%s362 + $0xb0] sm:$0xff]
        %v444 = vld [vmem:[%s362 + $0xb8] sm:$0xff]
        %v445 = vld [vmem:[%s362 + $0xc0] sm:$0xff]
        %v446 = vld [vmem:[%s362 + $0xc8] sm:$0xff]
        %v447 = vld [vmem:[%s362 + $0xd0] sm:$0xff]
        %v448 = vld [vmem:[%s362 + $0xd8] sm:$0xff]
        %v449 = vld [vmem:[%s362 + $0xe0] sm:$0xff]
        %v450 = vld [vmem:[%s362 + $0xe8] sm:$0xff]
        %v451 = vld [vmem:[%s362 + $0xf0] sm:$0xff]
        %v452 = vld [vmem:[%s362 + $0xf8] sm:$0xff]
        %v453 = vpack.c.bf16 %v423, %v421
        %v454 = vpack.c.bf16 %v424, %v422
        %v455 = vpack.c.bf16 %v427, %v425
        %v456 = vpack.c.bf16 %v428, %v426
        %v457 = vpack.c.bf16 %v431, %v429
        %v458 = vpack.c.bf16 %v432, %v430
        %v459 = vpack.c.bf16 %v435, %v433
        %v460 = vpack.c.bf16 %v436, %v434
        %v461 = vpack.c.bf16 %v439, %v437
        %v462 = vpack.c.bf16 %v440, %v438
        %v463 = vpack.c.bf16 %v443, %v441
        %v464 = vpack.c.bf16 %v444, %v442
        %v465 = vpack.c.bf16 %v447, %v445
        %v466 = vpack.c.bf16 %v448, %v446
        %v467 = vpack.c.bf16 %v451, %v449
        %v468 = vpack.c.bf16 %v452, %v450
        %v469 = vld [vmem:[#allocation5] sm:$0xff]
        %v470 = vld [vmem:[#allocation5 + $0x8] sm:$0xff]
        %v471 = vld [vmem:[#allocation5 + $0x10] sm:$0xff]
        %v472 = vld [vmem:[#allocation5 + $0x18] sm:$0xff]
        %v473 = vld [vmem:[#allocation5 + $0x20] sm:$0xff]
        %v474 = vld [vmem:[#allocation5 + $0x28] sm:$0xff]
        %v475 = vld [vmem:[#allocation5 + $0x30] sm:$0xff]
        %v476 = vld [vmem:[#allocation5 + $0x38] sm:$0xff]
        %v477 = vld [vmem:[#allocation5 + $0x40] sm:$0xff]
        %v478 = vld [vmem:[#allocation5 + $0x48] sm:$0xff]
        %v479 = vld [vmem:[#allocation5 + $0x50] sm:$0xff]
        %v480 = vld [vmem:[#allocation5 + $0x58] sm:$0xff]
        %v481 = vld [vmem:[#allocation5 + $0x60] sm:$0xff]
        %v482 = vld [vmem:[#allocation5 + $0x68] sm:$0xff]
        %v483 = vld [vmem:[#allocation5 + $0x70] sm:$0xff]
        %v484 = vld [vmem:[#allocation5 + $0x78] sm:$0xff]
        %v485 = vld [vmem:[#allocation5 + $0x80] sm:$0xff]
        %v486 = vld [vmem:[#allocation5 + $0x88] sm:$0xff]
        %v487 = vld [vmem:[#allocation5 + $0x90] sm:$0xff]
        %v488 = vld [vmem:[#allocation5 + $0x98] sm:$0xff]
        %v489 = vld [vmem:[#allocation5 + $0xa0] sm:$0xff]
        %v490 = vld [vmem:[#allocation5 + $0xa8] sm:$0xff]
        %v491 = vld [vmem:[#allocation5 + $0xb0] sm:$0xff]
        %v492 = vld [vmem:[#allocation5 + $0xb8] sm:$0xff]
        %v493 = vld [vmem:[#allocation5 + $0xc0] sm:$0xff]
        %v494 = vld [vmem:[#allocation5 + $0xc8] sm:$0xff]
        %v495 = vld [vmem:[#allocation5 + $0xd0] sm:$0xff]
        %v496 = vld [vmem:[#allocation5 + $0xd8] sm:$0xff]
        %v497 = vld [vmem:[#allocation5 + $0xe0] sm:$0xff]
        %v498 = vld [vmem:[#allocation5 + $0xe8] sm:$0xff]
        %v499 = vld [vmem:[#allocation5 + $0xf0] sm:$0xff]
        %v500 = vld [vmem:[#allocation5 + $0xf8] sm:$0xff]
        %v501 = vld [vmem:[#allocation5 + $0x100] sm:$0xff]
        %v502 = vld [vmem:[#allocation5 + $0x108] sm:$0xff]
        %v503 = vld [vmem:[#allocation5 + $0x110] sm:$0xff]
        %v504 = vld [vmem:[#allocation5 + $0x118] sm:$0xff]
        %v505 = vld [vmem:[#allocation5 + $0x120] sm:$0xff]
        %v506 = vld [vmem:[#allocation5 + $0x128] sm:$0xff]
        %v507 = vld [vmem:[#allocation5 + $0x130] sm:$0xff]
        %v508 = vld [vmem:[#allocation5 + $0x138] sm:$0xff]
        %v509 = vld [vmem:[#allocation5 + $0x140] sm:$0xff]
        %v510 = vld [vmem:[#allocation5 + $0x148] sm:$0xff]
        %v511 = vld [vmem:[#allocation5 + $0x150] sm:$0xff]
        %v512 = vld [vmem:[#allocation5 + $0x158] sm:$0xff]
        %v513 = vld [vmem:[#allocation5 + $0x160] sm:$0xff]
        %v514 = vld [vmem:[#allocation5 + $0x168] sm:$0xff]
        %v515 = vld [vmem:[#allocation5 + $0x170] sm:$0xff]
        %v516 = vld [vmem:[#allocation5 + $0x178] sm:$0xff]
        %v517 = vld [vmem:[#allocation5 + $0x180] sm:$0xff]
        %v518 = vld [vmem:[#allocation5 + $0x188] sm:$0xff]
        %v519 = vld [vmem:[#allocation5 + $0x190] sm:$0xff]
        %v520 = vld [vmem:[#allocation5 + $0x198] sm:$0xff]
        %v521 = vld [vmem:[#allocation5 + $0x1a0] sm:$0xff]
        %v522 = vld [vmem:[#allocation5 + $0x1a8] sm:$0xff]
        %v523 = vld [vmem:[#allocation5 + $0x1b0] sm:$0xff]
        %v524 = vld [vmem:[#allocation5 + $0x1b8] sm:$0xff]
        %v525 = vld [vmem:[#allocation5 + $0x1c0] sm:$0xff]
        %v526 = vld [vmem:[#allocation5 + $0x1c8] sm:$0xff]
        %v527 = vld [vmem:[#allocation5 + $0x1d0] sm:$0xff]
        %v528 = vld [vmem:[#allocation5 + $0x1d8] sm:$0xff]
        %v529 = vld [vmem:[#allocation5 + $0x1e0] sm:$0xff]
        %v530 = vld [vmem:[#allocation5 + $0x1e8] sm:$0xff]
        %v531 = vld [vmem:[#allocation5 + $0x1f0] sm:$0xff]
        %v532 = vld [vmem:[#allocation5 + $0x1f8] sm:$0xff]
        %v533 = vpack.c.bf16 %v471, %v469
        %v534 = vpack.c.bf16 %v472, %v470
        %v535 = vpack.c.bf16 %v475, %v473
        %v536 = vpack.c.bf16 %v476, %v474
        %v537 = vpack.c.bf16 %v479, %v477
        %v538 = vpack.c.bf16 %v480, %v478
        %v539 = vpack.c.bf16 %v483, %v481
        %v540 = vpack.c.bf16 %v484, %v482
        %v541 = vpack.c.bf16 %v487, %v485
        %v542 = vpack.c.bf16 %v488, %v486
        %v543 = vpack.c.bf16 %v491, %v489
        %v544 = vpack.c.bf16 %v492, %v490
        %v545 = vpack.c.bf16 %v495, %v493
        %v546 = vpack.c.bf16 %v496, %v494
        %v547 = vpack.c.bf16 %v499, %v497
        %v548 = vpack.c.bf16 %v500, %v498
        %v549 = vpack.c.bf16 %v503, %v501
        %v550 = vpack.c.bf16 %v504, %v502
        %v551 = vpack.c.bf16 %v507, %v505
        %v552 = vpack.c.bf16 %v508, %v506
        %v553 = vpack.c.bf16 %v511, %v509
        %v554 = vpack.c.bf16 %v512, %v510
        %v555 = vpack.c.bf16 %v515, %v513
        %v556 = vpack.c.bf16 %v516, %v514
        %v557 = vpack.c.bf16 %v519, %v517
        %v558 = vpack.c.bf16 %v520, %v518
        %v559 = vpack.c.bf16 %v523, %v521
        %v560 = vpack.c.bf16 %v524, %v522
        %v561 = vpack.c.bf16 %v527, %v525
        %v562 = vpack.c.bf16 %v528, %v526
        %v563 = vpack.c.bf16 %v531, %v529
        %v564 = vpack.c.bf16 %v532, %v530
        %v565 = vld [vmem:[#allocation7] sm:$0xff]
        %v566 = vld [vmem:[#allocation7 + $0x8] sm:$0xff]
        %v567 = vld [vmem:[#allocation7 + $0x10] sm:$0xff]
        %v568 = vld [vmem:[#allocation7 + $0x18] sm:$0xff]
        %v569 = vld [vmem:[#allocation7 + $0x20] sm:$0xff]
        %v570 = vld [vmem:[#allocation7 + $0x28] sm:$0xff]
        %v571 = vld [vmem:[#allocation7 + $0x30] sm:$0xff]
        %v572 = vld [vmem:[#allocation7 + $0x38] sm:$0xff]
        %v573 = vld [vmem:[#allocation7 + $0x40] sm:$0xff]
        %v574 = vld [vmem:[#allocation7 + $0x48] sm:$0xff]
        %v575 = vld [vmem:[#allocation7 + $0x50] sm:$0xff]
        %v576 = vld [vmem:[#allocation7 + $0x58] sm:$0xff]
        %v577 = vld [vmem:[#allocation7 + $0x60] sm:$0xff]
        %v578 = vld [vmem:[#allocation7 + $0x68] sm:$0xff]
        %v579 = vld [vmem:[#allocation7 + $0x70] sm:$0xff]
        %v580 = vld [vmem:[#allocation7 + $0x78] sm:$0xff]
        %v581 = vld [vmem:[#allocation7 + $0x80] sm:$0xff]
        %v582 = vld [vmem:[#allocation7 + $0x88] sm:$0xff]
        %v583 = vld [vmem:[#allocation7 + $0x90] sm:$0xff]
        %v584 = vld [vmem:[#allocation7 + $0x98] sm:$0xff]
        %v585 = vld [vmem:[#allocation7 + $0xa0] sm:$0xff]
        %v586 = vld [vmem:[#allocation7 + $0xa8] sm:$0xff]
        %v587 = vld [vmem:[#allocation7 + $0xb0] sm:$0xff]
        %v588 = vld [vmem:[#allocation7 + $0xb8] sm:$0xff]
        %v589 = vld [vmem:[#allocation7 + $0xc0] sm:$0xff]
        %v590 = vld [vmem:[#allocation7 + $0xc8] sm:$0xff]
        %v591 = vld [vmem:[#allocation7 + $0xd0] sm:$0xff]
        %v592 = vld [vmem:[#allocation7 + $0xd8] sm:$0xff]
        %v593 = vld [vmem:[#allocation7 + $0xe0] sm:$0xff]
        %v594 = vld [vmem:[#allocation7 + $0xe8] sm:$0xff]
        %v595 = vld [vmem:[#allocation7 + $0xf0] sm:$0xff]
        %v596 = vld [vmem:[#allocation7 + $0xf8] sm:$0xff]
        %v597 = vld [vmem:[#allocation7 + $0x100] sm:$0xff]
        %v598 = vld [vmem:[#allocation7 + $0x108] sm:$0xff]
        %v599 = vld [vmem:[#allocation7 + $0x110] sm:$0xff]
        %v600 = vld [vmem:[#allocation7 + $0x118] sm:$0xff]
        %v601 = vld [vmem:[#allocation7 + $0x120] sm:$0xff]
        %v602 = vld [vmem:[#allocation7 + $0x128] sm:$0xff]
        %v603 = vld [vmem:[#allocation7 + $0x130] sm:$0xff]
        %v604 = vld [vmem:[#allocation7 + $0x138] sm:$0xff]
        %v605 = vld [vmem:[#allocation7 + $0x140] sm:$0xff]
        %v606 = vld [vmem:[#allocation7 + $0x148] sm:$0xff]
        %v607 = vld [vmem:[#allocation7 + $0x150] sm:$0xff]
        %v608 = vld [vmem:[#allocation7 + $0x158] sm:$0xff]
        %v609 = vld [vmem:[#allocation7 + $0x160] sm:$0xff]
        %v610 = vld [vmem:[#allocation7 + $0x168] sm:$0xff]
        %v611 = vld [vmem:[#allocation7 + $0x170] sm:$0xff]
        %v612 = vld [vmem:[#allocation7 + $0x178] sm:$0xff]
        %v613 = vld [vmem:[#allocation7 + $0x180] sm:$0xff]
        %v614 = vld [vmem:[#allocation7 + $0x188] sm:$0xff]
        %v615 = vld [vmem:[#allocation7 + $0x190] sm:$0xff]
        %v616 = vld [vmem:[#allocation7 + $0x198] sm:$0xff]
        %v617 = vld [vmem:[#allocation7 + $0x1a0] sm:$0xff]
        %v618 = vld [vmem:[#allocation7 + $0x1a8] sm:$0xff]
        %v619 = vld [vmem:[#allocation7 + $0x1b0] sm:$0xff]
        %v620 = vld [vmem:[#allocation7 + $0x1b8] sm:$0xff]
        %v621 = vld [vmem:[#allocation7 + $0x1c0] sm:$0xff]
        %v622 = vld [vmem:[#allocation7 + $0x1c8] sm:$0xff]
        %v623 = vld [vmem:[#allocation7 + $0x1d0] sm:$0xff]
        %v624 = vld [vmem:[#allocation7 + $0x1d8] sm:$0xff]
        %v625 = vld [vmem:[#allocation7 + $0x1e0] sm:$0xff]
        %v626 = vld [vmem:[#allocation7 + $0x1e8] sm:$0xff]
        %v627 = vld [vmem:[#allocation7 + $0x1f0] sm:$0xff]
        %v628 = vld [vmem:[#allocation7 + $0x1f8] sm:$0xff]
        %v629 = vpack.c.bf16 %v567, %v565
        %v630 = vpack.c.bf16 %v568, %v566
        %v631 = vpack.c.bf16 %v571, %v569
        %v632 = vpack.c.bf16 %v572, %v570
        %v633 = vpack.c.bf16 %v575, %v573
        %v634 = vpack.c.bf16 %v576, %v574
        %v635 = vpack.c.bf16 %v579, %v577
        %v636 = vpack.c.bf16 %v580, %v578
        %v637 = vpack.c.bf16 %v583, %v581
        %v638 = vpack.c.bf16 %v584, %v582
        %v639 = vpack.c.bf16 %v587, %v585
        %v640 = vpack.c.bf16 %v588, %v586
        %v641 = vpack.c.bf16 %v591, %v589
        %v642 = vpack.c.bf16 %v592, %v590
        %v643 = vpack.c.bf16 %v595, %v593
        %v644 = vpack.c.bf16 %v596, %v594
        %v645 = vpack.c.bf16 %v599, %v597
        %v646 = vpack.c.bf16 %v600, %v598
        %v647 = vpack.c.bf16 %v603, %v601
        %v648 = vpack.c.bf16 %v604, %v602
        %v649 = vpack.c.bf16 %v607, %v605
        %v650 = vpack.c.bf16 %v608, %v606
        %v651 = vpack.c.bf16 %v611, %v609
        %v652 = vpack.c.bf16 %v612, %v610
        %v653 = vpack.c.bf16 %v615, %v613
        %v654 = vpack.c.bf16 %v616, %v614
        %v655 = vpack.c.bf16 %v619, %v617
        %v656 = vpack.c.bf16 %v620, %v618
        %v657 = vpack.c.bf16 %v623, %v621
        %v658 = vpack.c.bf16 %v624, %v622
        %v659 = vpack.c.bf16 %v627, %v625
        %v660 = vpack.c.bf16 %v628, %v626
        %v661 = vld [vmem:[#allocation8] sm:$0xff]
        %v662 = vld [vmem:[#allocation8 + $0x8] sm:$0xff]
        %v663 = vld [vmem:[#allocation8 + $0x10] sm:$0xff]
        %v664 = vld [vmem:[#allocation8 + $0x18] sm:$0xff]
        %v665 = vld [vmem:[#allocation8 + $0x20] sm:$0xff]
        %v666 = vld [vmem:[#allocation8 + $0x28] sm:$0xff]
        %v667 = vld [vmem:[#allocation8 + $0x30] sm:$0xff]
        %v668 = vld [vmem:[#allocation8 + $0x38] sm:$0xff]
        %v669 = vld [vmem:[#allocation8 + $0x40] sm:$0xff]
        %v670 = vld [vmem:[#allocation8 + $0x48] sm:$0xff]
        %v671 = vld [vmem:[#allocation8 + $0x50] sm:$0xff]
        %v672 = vld [vmem:[#allocation8 + $0x58] sm:$0xff]
        %v673 = vld [vmem:[#allocation8 + $0x60] sm:$0xff]
        %v674 = vld [vmem:[#allocation8 + $0x68] sm:$0xff]
        %v675 = vld [vmem:[#allocation8 + $0x70] sm:$0xff]
        %v676 = vld [vmem:[#allocation8 + $0x78] sm:$0xff]
        %v677 = vld [vmem:[#allocation8 + $0x80] sm:$0xff]
        %v678 = vld [vmem:[#allocation8 + $0x88] sm:$0xff]
        %v679 = vld [vmem:[#allocation8 + $0x90] sm:$0xff]
        %v680 = vld [vmem:[#allocation8 + $0x98] sm:$0xff]
        %v681 = vld [vmem:[#allocation8 + $0xa0] sm:$0xff]
        %v682 = vld [vmem:[#allocation8 + $0xa8] sm:$0xff]
        %v683 = vld [vmem:[#allocation8 + $0xb0] sm:$0xff]
        %v684 = vld [vmem:[#allocation8 + $0xb8] sm:$0xff]
        %v685 = vld [vmem:[#allocation8 + $0xc0] sm:$0xff]
        %v686 = vld [vmem:[#allocation8 + $0xc8] sm:$0xff]
        %v687 = vld [vmem:[#allocation8 + $0xd0] sm:$0xff]
        %v688 = vld [vmem:[#allocation8 + $0xd8] sm:$0xff]
        %v689 = vld [vmem:[#allocation8 + $0xe0] sm:$0xff]
        %v690 = vld [vmem:[#allocation8 + $0xe8] sm:$0xff]
        %v691 = vld [vmem:[#allocation8 + $0xf0] sm:$0xff]
        %v692 = vld [vmem:[#allocation8 + $0xf8] sm:$0xff]
        %v693 = vld [vmem:[#allocation8 + $0x100] sm:$0xff]
        %v694 = vld [vmem:[#allocation8 + $0x108] sm:$0xff]
        %v695 = vld [vmem:[#allocation8 + $0x110] sm:$0xff]
        %v696 = vld [vmem:[#allocation8 + $0x118] sm:$0xff]
        %v697 = vld [vmem:[#allocation8 + $0x120] sm:$0xff]
        %v698 = vld [vmem:[#allocation8 + $0x128] sm:$0xff]
        %v699 = vld [vmem:[#allocation8 + $0x130] sm:$0xff]
        %v700 = vld [vmem:[#allocation8 + $0x138] sm:$0xff]
        %v701 = vld [vmem:[#allocation8 + $0x140] sm:$0xff]
        %v702 = vld [vmem:[#allocation8 + $0x148] sm:$0xff]
        %v703 = vld [vmem:[#allocation8 + $0x150] sm:$0xff]
        %v704 = vld [vmem:[#allocation8 + $0x158] sm:$0xff]
        %v705 = vld [vmem:[#allocation8 + $0x160] sm:$0xff]
        %v706 = vld [vmem:[#allocation8 + $0x168] sm:$0xff]
        %v707 = vld [vmem:[#allocation8 + $0x170] sm:$0xff]
        %v708 = vld [vmem:[#allocation8 + $0x178] sm:$0xff]
        %v709 = vld [vmem:[#allocation8 + $0x180] sm:$0xff]
        %v710 = vld [vmem:[#allocation8 + $0x188] sm:$0xff]
        %v711 = vld [vmem:[#allocation8 + $0x190] sm:$0xff]
        %v712 = vld [vmem:[#allocation8 + $0x198] sm:$0xff]
        %v713 = vld [vmem:[#allocation8 + $0x1a0] sm:$0xff]
        %v714 = vld [vmem:[#allocation8 + $0x1a8] sm:$0xff]
        %v715 = vld [vmem:[#allocation8 + $0x1b0] sm:$0xff]
        %v716 = vld [vmem:[#allocation8 + $0x1b8] sm:$0xff]
        %v717 = vld [vmem:[#allocation8 + $0x1c0] sm:$0xff]
        %v718 = vld [vmem:[#allocation8 + $0x1c8] sm:$0xff]
        %v719 = vld [vmem:[#allocation8 + $0x1d0] sm:$0xff]
        %v720 = vld [vmem:[#allocation8 + $0x1d8] sm:$0xff]
        %v721 = vld [vmem:[#allocation8 + $0x1e0] sm:$0xff]
        %v722 = vld [vmem:[#allocation8 + $0x1e8] sm:$0xff]
        %v723 = vld [vmem:[#allocation8 + $0x1f0] sm:$0xff]
        %v724 = vld [vmem:[#allocation8 + $0x1f8] sm:$0xff]
        %v725 = vpack.c.bf16 %v663, %v661
        %v726 = vpack.c.bf16 %v664, %v662
        %v727 = vpack.c.bf16 %v667, %v665
        %v728 = vpack.c.bf16 %v668, %v666
        %v729 = vpack.c.bf16 %v671, %v669
        %v730 = vpack.c.bf16 %v672, %v670
        %v731 = vpack.c.bf16 %v675, %v673
        %v732 = vpack.c.bf16 %v676, %v674
        %v733 = vpack.c.bf16 %v679, %v677
        %v734 = vpack.c.bf16 %v680, %v678
        %v735 = vpack.c.bf16 %v683, %v681
        %v736 = vpack.c.bf16 %v684, %v682
        %v737 = vpack.c.bf16 %v687, %v685
        %v738 = vpack.c.bf16 %v688, %v686
        %v739 = vpack.c.bf16 %v691, %v689
        %v740 = vpack.c.bf16 %v692, %v690
        %v741 = vpack.c.bf16 %v695, %v693
        %v742 = vpack.c.bf16 %v696, %v694
        %v743 = vpack.c.bf16 %v699, %v697
        %v744 = vpack.c.bf16 %v700, %v698
        %v745 = vpack.c.bf16 %v703, %v701
        %v746 = vpack.c.bf16 %v704, %v702
        %v747 = vpack.c.bf16 %v707, %v705
        %v748 = vpack.c.bf16 %v708, %v706
        %v749 = vpack.c.bf16 %v711, %v709
        %v750 = vpack.c.bf16 %v712, %v710
        %v751 = vpack.c.bf16 %v715, %v713
        %v752 = vpack.c.bf16 %v716, %v714
        %v753 = vpack.c.bf16 %v719, %v717
        %v754 = vpack.c.bf16 %v720, %v718
        %v755 = vpack.c.bf16 %v723, %v721
        %v756 = vpack.c.bf16 %v724, %v722
        %v757 = vld [vmem:[%s2] sm:$0x3]
        %v759 = vlaneseq
        %v760 = vshrl.u32 %v759, 7
        %v761 = vsub.s32 0, %v760
        %v762 = vrot.slane %v757, %v761
        %v763 = vlaneseq
        %v764 = vshrl.u32 %v763, 7
        %v765 = vsub.s32 1, %v764
        %v766 = vrot.slane %v757, %v765
        %769 = vmatprep.subr.bf16.mxu0 %v534
        %770 = vmatpush1.bf16.msra.mxu0 %v533
        %771 = vmatprep.subr.bf16.mxu0 %v536
        %772 = vmatpush1.bf16.msra.mxu0 %v535
        %773 = vmatprep.subr.bf16.mxu0 %v538
        %774 = vmatpush1.bf16.msra.mxu0 %v537
        %775 = vmatprep.subr.bf16.mxu0 %v540
        %776 = vmatpush1.bf16.msra.mxu0 %v539
        %777 = vmatprep.subr.bf16.mxu0 %v542
        %778 = vmatpush1.bf16.msra.mxu0 %v541
        %779 = vmatprep.subr.bf16.mxu0 %v544
        %780 = vmatpush1.bf16.msra.mxu0 %v543
        %781 = vmatprep.subr.bf16.mxu0 %v546
        %782 = vmatpush1.bf16.msra.mxu0 %v545
        %783 = vmatprep.subr.bf16.mxu0 %v548
        %784 = vmatpush1.bf16.msra.mxu0 %v547
        %785 = vmatprep.subr.bf16.mxu0 %v550
        %786 = vmatpush1.bf16.msra.mxu0 %v549
        %787 = vmatprep.subr.bf16.mxu0 %v552
        %788 = vmatpush1.bf16.msra.mxu0 %v551
        %789 = vmatprep.subr.bf16.mxu0 %v554
        %790 = vmatpush1.bf16.msra.mxu0 %v553
        %791 = vmatprep.subr.bf16.mxu0 %v556
        %792 = vmatpush1.bf16.msra.mxu0 %v555
        %793 = vmatprep.subr.bf16.mxu0 %v558
        %794 = vmatpush1.bf16.msra.mxu0 %v557
        %795 = vmatprep.subr.bf16.mxu0 %v560
        %796 = vmatpush1.bf16.msra.mxu0 %v559
        %797 = vmatprep.subr.bf16.mxu0 %v562
        %798 = vmatpush1.bf16.msra.mxu0 %v561
        %799 = vmatprep.subr.bf16.mxu0 %v564
        %800 = vmatpush1.bf16.msra.mxu0 %v563
        %801 = vmatprep.mubr.bf16.mxu0 %v454
        %802 = vmatmul.mubr.bf16.gmra.mrb[0].mxu0 %v453
        %v803 = vpop.f32.mrb[0].mxu0
        %v804 = vadd.f32 %v762, %v803
        %v805 = vpop.f32.mrb[0].mxu0
        %v806 = vadd.f32 %v766, %v805
        %v807 = vpop.f32.mrb[0].mxu0
        %v808 = vadd.f32 %v762, %v807
        %v809 = vpop.f32.mrb[0].mxu0
        %v810 = vadd.f32 %v766, %v809
        %811 = vmatprep.mubr.bf16.mxu0 %v456
        %812 = vmatmul.mubr.bf16.gmra.mrb[0].mxu0 %v455
        %v813 = vpop.f32.mrb[0].mxu0
        %v814 = vadd.f32 %v762, %v813
        %v815 = vpop.f32.mrb[0].mxu0
        %v816 = vadd.f32 %v766, %v815
        %v817 = vpop.f32.mrb[0].mxu0
        %v818 = vadd.f32 %v762, %v817
        %v819 = vpop.f32.mrb[0].mxu0
        %v820 = vadd.f32 %v766, %v819
        %821 = vmatprep.mubr.bf16.mxu0 %v458
        %822 = vmatmul.mubr.bf16.gmra.mrb[0].mxu0 %v457
        %v823 = vpop.f32.mrb[0].mxu0
        %v824 = vadd.f32 %v762, %v823
        %v825 = vpop.f32.mrb[0].mxu0
        %v826 = vadd.f32 %v766, %v825
        %v827 = vpop.f32.mrb[0].mxu0
        %v828 = vadd.f32 %v762, %v827
        %v829 = vpop.f32.mrb[0].mxu0
        %v830 = vadd.f32 %v766, %v829
        %831 = vmatprep.mubr.bf16.mxu0 %v460
        %832 = vmatmul.mubr.bf16.gmra.mrb[0].mxu0 %v459
        %v833 = vpop.f32.mrb[0].mxu0
        %v834 = vadd.f32 %v762, %v833
        %v835 = vpop.f32.mrb[0].mxu0
        %v836 = vadd.f32 %v766, %v835
        %v837 = vpop.f32.mrb[0].mxu0
        %v838 = vadd.f32 %v762, %v837
        %v839 = vpop.f32.mrb[0].mxu0
        %v840 = vadd.f32 %v766, %v839
        %841 = vmatprep.mubr.bf16.mxu0 %v462
        %842 = vmatmul.mubr.bf16.gmra.mrb[0].mxu0 %v461
        %v843 = vpop.f32.mrb[0].mxu0
        %v844 = vadd.f32 %v762, %v843
        %v845 = vpop.f32.mrb[0].mxu0
        %v846 = vadd.f32 %v766, %v845
        %v847 = vpop.f32.mrb[0].mxu0
        %v848 = vadd.f32 %v762, %v847
        %v849 = vpop.f32.mrb[0].mxu0
        %v850 = vadd.f32 %v766, %v849
        %851 = vmatprep.mubr.bf16.mxu0 %v464
        %852 = vmatmul.mubr.bf16.gmra.mrb[0].mxu0 %v463
        %v853 = vpop.f32.mrb[0].mxu0
        %v854 = vadd.f32 %v762, %v853
        %v855 = vpop.f32.mrb[0].mxu0
        %v856 = vadd.f32 %v766, %v855
        %v857 = vpop.f32.mrb[0].mxu0
        %v858 = vadd.f32 %v762, %v857
        %v859 = vpop.f32.mrb[0].mxu0
        %v860 = vadd.f32 %v766, %v859
        %861 = vmatprep.mubr.bf16.mxu0 %v466
        %862 = vmatmul.mubr.bf16.gmra.mrb[0].mxu0 %v465
        %v863 = vpop.f32.mrb[0].mxu0
        %v864 = vadd.f32 %v762, %v863
        %v865 = vpop.f32.mrb[0].mxu0
        %v866 = vadd.f32 %v766, %v865
        %v867 = vpop.f32.mrb[0].mxu0
        %v868 = vadd.f32 %v762, %v867
        %v869 = vpop.f32.mrb[0].mxu0
        %v870 = vadd.f32 %v766, %v869
        %871 = vmatprep.mubr.bf16.mxu0 %v468
        %872 = vmatmul.mubr.bf16.gmra.mrb[0].mxu0 %v467
        %v873 = vpop.f32.mrb[0].mxu0
        %v874 = vadd.f32 %v762, %v873
        %v875 = vpop.f32.mrb[0].mxu0
        %v876 = vadd.f32 %v766, %v875
        %v877 = vpop.f32.mrb[0].mxu0
        %v878 = vadd.f32 %v762, %v877
        %v879 = vpop.f32.mrb[0].mxu0
        %v880 = vadd.f32 %v766, %v879
        %881 = vdwg.mxu0
        %v882 = vmul.f32 %v804, 0.088388346
        %v883 = vmul.f32 %v806, 0.088388346
        %v884 = vmul.f32 %v808, 0.088388346
        %v885 = vmul.f32 %v810, 0.088388346
        %v886 = vmul.f32 %v814, 0.088388346
        %v887 = vmul.f32 %v816, 0.088388346
        %v888 = vmul.f32 %v818, 0.088388346
        %v889 = vmul.f32 %v820, 0.088388346
        %v890 = vmul.f32 %v824, 0.088388346
        %v891 = vmul.f32 %v826, 0.088388346
        %v892 = vmul.f32 %v828, 0.088388346
        %v893 = vmul.f32 %v830, 0.088388346
        %v894 = vmul.f32 %v834, 0.088388346
        %v895 = vmul.f32 %v836, 0.088388346
        %v896 = vmul.f32 %v838, 0.088388346
        %v897 = vmul.f32 %v840, 0.088388346
        %v898 = vmul.f32 %v844, 0.088388346
        %v899 = vmul.f32 %v846, 0.088388346
        %v900 = vmul.f32 %v848, 0.088388346
        %v901 = vmul.f32 %v850, 0.088388346
        %v902 = vmul.f32 %v854, 0.088388346
        %v903 = vmul.f32 %v856, 0.088388346
        %v904 = vmul.f32 %v858, 0.088388346
        %v905 = vmul.f32 %v860, 0.088388346
        %v906 = vmul.f32 %v864, 0.088388346
        %v907 = vmul.f32 %v866, 0.088388346
        %v908 = vmul.f32 %v868, 0.088388346
        %v909 = vmul.f32 %v870, 0.088388346
        %v910 = vmul.f32 %v874, 0.088388346
        %v911 = vmul.f32 %v876, 0.088388346
        %v912 = vmul.f32 %v878, 0.088388346
        %v913 = vmul.f32 %v880, 0.088388346
        %v914 = vld [vmem:[%s4] sm:$0x3]
        %v916 = vlaneseq
        %v917 = vshrl.u32 %v916, 7
        %v918 = vsub.s32 0, %v917
        %v919 = vrot.slane %v914, %v918
        %v920 = vlaneseq
        %v921 = vshrl.u32 %v920, 7
        %v922 = vsub.s32 1, %v921
        %v923 = vrot.slane %v914, %v922
        %926 = vmatprep.subr.bf16.mxu0 %v630
        %927 = vmatpush1.bf16.msra.mxu0 %v629
        %928 = vmatprep.subr.bf16.mxu0 %v632
        %929 = vmatpush1.bf16.msra.mxu0 %v631
        %930 = vmatprep.subr.bf16.mxu0 %v634
        %931 = vmatpush1.bf16.msra.mxu0 %v633
        %932 = vmatprep.subr.bf16.mxu0 %v636
        %933 = vmatpush1.bf16.msra.mxu0 %v635
        %934 = vmatprep.subr.bf16.mxu0 %v638
        %935 = vmatpush1.bf16.msra.mxu0 %v637
        %936 = vmatprep.subr.bf16.mxu0 %v640
        %937 = vmatpush1.bf16.msra.mxu0 %v639
        %938 = vmatprep.subr.bf16.mxu0 %v642
        %939 = vmatpush1.bf16.msra.mxu0 %v641
        %940 = vmatprep.subr.bf16.mxu0 %v644
        %941 = vmatpush1.bf16.msra.mxu0 %v643
        %942 = vmatprep.subr.bf16.mxu0 %v646
        %943 = vmatpush1.bf16.msra.mxu0 %v645
        %944 = vmatprep.subr.bf16.mxu0 %v648
        %945 = vmatpush1.bf16.msra.mxu0 %v647
        %946 = vmatprep.subr.bf16.mxu0 %v650
        %947 = vmatpush1.bf16.msra.mxu0 %v649
        %948 = vmatprep.subr.bf16.mxu0 %v652
        %949 = vmatpush1.bf16.msra.mxu0 %v651
        %950 = vmatprep.subr.bf16.mxu0 %v654
        %951 = vmatpush1.bf16.msra.mxu0 %v653
        %952 = vmatprep.subr.bf16.mxu0 %v656
        %953 = vmatpush1.bf16.msra.mxu0 %v655
        %954 = vmatprep.subr.bf16.mxu0 %v658
        %955 = vmatpush1.bf16.msra.mxu0 %v657
        %956 = vmatprep.subr.bf16.mxu0 %v660
        %957 = vmatpush1.bf16.msra.mxu0 %v659
        %958 = vmatprep.mubr.bf16.mxu0 %v454
        %959 = vmatmul.mubr.bf16.gmra.mrb[0].mxu0 %v453
        %v960 = vpop.f32.mrb[0].mxu0
        %v961 = vadd.f32 %v919, %v960
        %v962 = vpop.f32.mrb[0].mxu0
        %v963 = vadd.f32 %v923, %v962
        %v964 = vpop.f32.mrb[0].mxu0
        %v965 = vadd.f32 %v919, %v964
        %v966 = vpop.f32.mrb[0].mxu0
        %v967 = vadd.f32 %v923, %v966
        %968 = vmatprep.mubr.bf16.mxu0 %v456
        %969 = vmatmul.mubr.bf16.gmra.mrb[0].mxu0 %v455
        %v970 = vpop.f32.mrb[0].mxu0
        %v971 = vadd.f32 %v919, %v970
        %v972 = vpop.f32.mrb[0].mxu0
        %v973 = vadd.f32 %v923, %v972
        %v974 = vpop.f32.mrb[0].mxu0
        %v975 = vadd.f32 %v919, %v974
        %v976 = vpop.f32.mrb[0].mxu0
        %v977 = vadd.f32 %v923, %v976
        %978 = vmatprep.mubr.bf16.mxu0 %v458
        %979 = vmatmul.mubr.bf16.gmra.mrb[0].mxu0 %v457
        %v980 = vpop.f32.mrb[0].mxu0
        %v981 = vadd.f32 %v919, %v980
        %v982 = vpop.f32.mrb[0].mxu0
        %v983 = vadd.f32 %v923, %v982
        %v984 = vpop.f32.mrb[0].mxu0
        %v985 = vadd.f32 %v919, %v984
        %v986 = vpop.f32.mrb[0].mxu0
        %v987 = vadd.f32 %v923, %v986
        %988 = vmatprep.mubr.bf16.mxu0 %v460
        %989 = vmatmul.mubr.bf16.gmra.mrb[0].mxu0 %v459
        %v990 = vpop.f32.mrb[0].mxu0
        %v991 = vadd.f32 %v919, %v990
        %v992 = vpop.f32.mrb[0].mxu0
        %v993 = vadd.f32 %v923, %v992
        %v994 = vpop.f32.mrb[0].mxu0
        %v995 = vadd.f32 %v919, %v994
        %v996 = vpop.f32.mrb[0].mxu0
        %v997 = vadd.f32 %v923, %v996
        %998 = vmatprep.mubr.bf16.mxu0 %v462
        %999 = vmatmul.mubr.bf16.gmra.mrb[0].mxu0 %v461
        %v1000 = vpop.f32.mrb[0].mxu0
        %v1001 = vadd.f32 %v919, %v1000
        %v1002 = vpop.f32.mrb[0].mxu0
        %v1003 = vadd.f32 %v923, %v1002
        %v1004 = vpop.f32.mrb[0].mxu0
        %v1005 = vadd.f32 %v919, %v1004
        %v1006 = vpop.f32.mrb[0].mxu0
        %v1007 = vadd.f32 %v923, %v1006
        %1008 = vmatprep.mubr.bf16.mxu0 %v464
        %1009 = vmatmul.mubr.bf16.gmra.mrb[0].mxu0 %v463
        %v1010 = vpop.f32.mrb[0].mxu0
        %v1011 = vadd.f32 %v919, %v1010
        %v1012 = vpop.f32.mrb[0].mxu0
        %v1013 = vadd.f32 %v923, %v1012
        %v1014 = vpop.f32.mrb[0].mxu0
        %v1015 = vadd.f32 %v919, %v1014
        %v1016 = vpop.f32.mrb[0].mxu0
        %v1017 = vadd.f32 %v923, %v1016
        %1018 = vmatprep.mubr.bf16.mxu0 %v466
        %1019 = vmatmul.mubr.bf16.gmra.mrb[0].mxu0 %v465
        %v1020 = vpop.f32.mrb[0].mxu0
        %v1021 = vadd.f32 %v919, %v1020
        %v1022 = vpop.f32.mrb[0].mxu0
        %v1023 = vadd.f32 %v923, %v1022
        %v1024 = vpop.f32.mrb[0].mxu0
        %v1025 = vadd.f32 %v919, %v1024
        %v1026 = vpop.f32.mrb[0].mxu0
        %v1027 = vadd.f32 %v923, %v1026
        %1028 = vmatprep.mubr.bf16.mxu0 %v468
        %1029 = vmatmul.mubr.bf16.gmra.mrb[0].mxu0 %v467
        %v1030 = vpop.f32.mrb[0].mxu0
        %v1031 = vadd.f32 %v919, %v1030
        %v1032 = vpop.f32.mrb[0].mxu0
        %v1033 = vadd.f32 %v923, %v1032
        %v1034 = vpop.f32.mrb[0].mxu0
        %v1035 = vadd.f32 %v919, %v1034
        %v1036 = vpop.f32.mrb[0].mxu0
        %v1037 = vadd.f32 %v923, %v1036
        %1038 = vdwg.mxu0
        %v1039 = vld [vmem:[%s6] sm:$0x3]
        %v1041 = vlaneseq
        %v1042 = vshrl.u32 %v1041, 7
        %v1043 = vsub.s32 0, %v1042
        %v1044 = vrot.slane %v1039, %v1043
        %v1045 = vlaneseq
        %v1046 = vshrl.u32 %v1045, 7
        %v1047 = vsub.s32 1, %v1046
        %v1048 = vrot.slane %v1039, %v1047
        %1051 = vmatprep.subr.bf16.mxu0 %v726
        %1052 = vmatpush1.bf16.msra.mxu0 %v725
        %1053 = vmatprep.subr.bf16.mxu0 %v728
        %1054 = vmatpush1.bf16.msra.mxu0 %v727
        %1055 = vmatprep.subr.bf16.mxu0 %v730
        %1056 = vmatpush1.bf16.msra.mxu0 %v729
        %1057 = vmatprep.subr.bf16.mxu0 %v732
        %1058 = vmatpush1.bf16.msra.mxu0 %v731
        %1059 = vmatprep.subr.bf16.mxu0 %v734
        %1060 = vmatpush1.bf16.msra.mxu0 %v733
        %1061 = vmatprep.subr.bf16.mxu0 %v736
        %1062 = vmatpush1.bf16.msra.mxu0 %v735
        %1063 = vmatprep.subr.bf16.mxu0 %v738
        %1064 = vmatpush1.bf16.msra.mxu0 %v737
        %1065 = vmatprep.subr.bf16.mxu0 %v740
        %1066 = vmatpush1.bf16.msra.mxu0 %v739
        %1067 = vmatprep.subr.bf16.mxu0 %v742
        %1068 = vmatpush1.bf16.msra.mxu0 %v741
        %1069 = vmatprep.subr.bf16.mxu0 %v744
        %1070 = vmatpush1.bf16.msra.mxu0 %v743
        %1071 = vmatprep.subr.bf16.mxu0 %v746
        %1072 = vmatpush1.bf16.msra.mxu0 %v745
        %1073 = vmatprep.subr.bf16.mxu0 %v748
        %1074 = vmatpush1.bf16.msra.mxu0 %v747
        %1075 = vmatprep.subr.bf16.mxu0 %v750
        %1076 = vmatpush1.bf16.msra.mxu0 %v749
        %1077 = vmatprep.subr.bf16.mxu0 %v752
        %1078 = vmatpush1.bf16.msra.mxu0 %v751
        %1079 = vmatprep.subr.bf16.mxu0 %v754
        %1080 = vmatpush1.bf16.msra.mxu0 %v753
        %1081 = vmatprep.subr.bf16.mxu0 %v756
        %1082 = vmatpush1.bf16.msra.mxu0 %v755
        %1083 = vmatprep.mubr.bf16.mxu0 %v454
        %1084 = vmatmul.mubr.bf16.gmra.mrb[0].mxu0 %v453
        %v1085 = vpop.f32.mrb[0].mxu0
        %v1086 = vadd.f32 %v1044, %v1085
        %v1087 = vpop.f32.mrb[0].mxu0
        %v1088 = vadd.f32 %v1048, %v1087
        %v1089 = vpop.f32.mrb[0].mxu0
        %v1090 = vadd.f32 %v1044, %v1089
        %v1091 = vpop.f32.mrb[0].mxu0
        %v1092 = vadd.f32 %v1048, %v1091
        %1093 = vmatprep.mubr.bf16.mxu0 %v456
        %1094 = vmatmul.mubr.bf16.gmra.mrb[0].mxu0 %v455
        %v1095 = vpop.f32.mrb[0].mxu0
        %v1096 = vadd.f32 %v1044, %v1095
        %v1097 = vpop.f32.mrb[0].mxu0
        %v1098 = vadd.f32 %v1048, %v1097
        %v1099 = vpop.f32.mrb[0].mxu0
        %v1100 = vadd.f32 %v1044, %v1099
        %v1101 = vpop.f32.mrb[0].mxu0
        %v1102 = vadd.f32 %v1048, %v1101
        %1103 = vmatprep.mubr.bf16.mxu0 %v458
        %1104 = vmatmul.mubr.bf16.gmra.mrb[0].mxu0 %v457
        %v1105 = vpop.f32.mrb[0].mxu0
        %v1106 = vadd.f32 %v1044, %v1105
        %v1107 = vpop.f32.mrb[0].mxu0
        %v1108 = vadd.f32 %v1048, %v1107
        %v1109 = vpop.f32.mrb[0].mxu0
        %v1110 = vadd.f32 %v1044, %v1109
        %v1111 = vpop.f32.mrb[0].mxu0
        %v1112 = vadd.f32 %v1048, %v1111
        %1113 = vmatprep.mubr.bf16.mxu0 %v460
        %1114 = vmatmul.mubr.bf16.gmra.mrb[0].mxu0 %v459
        %v1115 = vpop.f32.mrb[0].mxu0
        %v1116 = vadd.f32 %v1044, %v1115
        %v1117 = vpop.f32.mrb[0].mxu0
        %v1118 = vadd.f32 %v1048, %v1117
        %v1119 = vpop.f32.mrb[0].mxu0
        %v1120 = vadd.f32 %v1044, %v1119
        %v1121 = vpop.f32.mrb[0].mxu0
        %v1122 = vadd.f32 %v1048, %v1121
        %1123 = vmatprep.mubr.bf16.mxu0 %v462
        %1124 = vmatmul.mubr.bf16.gmra.mrb[0].mxu0 %v461
        %v1125 = vpop.f32.mrb[0].mxu0
        %v1126 = vadd.f32 %v1044, %v1125
        %v1127 = vpop.f32.mrb[0].mxu0
        %v1128 = vadd.f32 %v1048, %v1127
        %v1129 = vpop.f32.mrb[0].mxu0
        %v1130 = vadd.f32 %v1044, %v1129
        %v1131 = vpop.f32.mrb[0].mxu0
        %v1132 = vadd.f32 %v1048, %v1131
        %1133 = vmatprep.mubr.bf16.mxu0 %v464
        %1134 = vmatmul.mubr.bf16.gmra.mrb[0].mxu0 %v463
        %v1135 = vpop.f32.mrb[0].mxu0
        %v1136 = vadd.f32 %v1044, %v1135
        %v1137 = vpop.f32.mrb[0].mxu0
        %v1138 = vadd.f32 %v1048, %v1137
        %v1139 = vpop.f32.mrb[0].mxu0
        %v1140 = vadd.f32 %v1044, %v1139
        %v1141 = vpop.f32.mrb[0].mxu0
        %v1142 = vadd.f32 %v1048, %v1141
        %1143 = vmatprep.mubr.bf16.mxu0 %v466
        %1144 = vmatmul.mubr.bf16.gmra.mrb[0].mxu0 %v465
        %v1145 = vpop.f32.mrb[0].mxu0
        %v1146 = vadd.f32 %v1044, %v1145
        %v1147 = vpop.f32.mrb[0].mxu0
        %v1148 = vadd.f32 %v1048, %v1147
        %v1149 = vpop.f32.mrb[0].mxu0
        %v1150 = vadd.f32 %v1044, %v1149
        %v1151 = vpop.f32.mrb[0].mxu0
        %v1152 = vadd.f32 %v1048, %v1151
        %1153 = vmatprep.mubr.bf16.mxu0 %v468
        %1154 = vmatmul.mubr.bf16.gmra.mrb[0].mxu0 %v467
        %v1155 = vpop.f32.mrb[0].mxu0
        %v1156 = vadd.f32 %v1044, %v1155
        %v1157 = vpop.f32.mrb[0].mxu0
        %v1158 = vadd.f32 %v1048, %v1157
        %v1159 = vpop.f32.mrb[0].mxu0
        %v1160 = vadd.f32 %v1044, %v1159
        %v1161 = vpop.f32.mrb[0].mxu0
        %v1162 = vadd.f32 %v1048, %v1161
        %1163 = vdwg.mxu0
        %v1164 = vpack.c.bf16 %v884, %v882
        %v1165 = vpack.c.bf16 %v885, %v883
        %v1166 = vpack.c.bf16 %v888, %v886
        %v1167 = vpack.c.bf16 %v889, %v887
        %v1168 = vpack.c.bf16 %v892, %v890
        %v1169 = vpack.c.bf16 %v893, %v891
        %v1170 = vpack.c.bf16 %v896, %v894
        %v1171 = vpack.c.bf16 %v897, %v895
        %v1172 = vpack.c.bf16 %v900, %v898
        %v1173 = vpack.c.bf16 %v901, %v899
        %v1174 = vpack.c.bf16 %v904, %v902
        %v1175 = vpack.c.bf16 %v905, %v903
        %v1176 = vpack.c.bf16 %v908, %v906
        %v1177 = vpack.c.bf16 %v909, %v907
        %v1178 = vpack.c.bf16 %v912, %v910
        %v1179 = vpack.c.bf16 %v913, %v911
        %v1180 = vpack.c.bf16 %v965, %v961
        %v1181 = vpack.c.bf16 %v967, %v963
        %v1182 = vpack.c.bf16 %v975, %v971
        %v1183 = vpack.c.bf16 %v977, %v973
        %v1184 = vpack.c.bf16 %v985, %v981
        %v1185 = vpack.c.bf16 %v987, %v983
        %v1186 = vpack.c.bf16 %v995, %v991
        %v1187 = vpack.c.bf16 %v997, %v993
        %v1188 = vpack.c.bf16 %v1005, %v1001
        %v1189 = vpack.c.bf16 %v1007, %v1003
        %v1190 = vpack.c.bf16 %v1015, %v1011
        %v1191 = vpack.c.bf16 %v1017, %v1013
        %v1192 = vpack.c.bf16 %v1025, %v1021
        %v1193 = vpack.c.bf16 %v1027, %v1023
        %v1194 = vpack.c.bf16 %v1035, %v1031
        %v1195 = vpack.c.bf16 %v1037, %v1033
        %v1196 = vpack.c.bf16 %v1090, %v1086
        %v1197 = vpack.c.bf16 %v1092, %v1088
        %v1198 = vpack.c.bf16 %v1100, %v1096
        %v1199 = vpack.c.bf16 %v1102, %v1098
        %v1200 = vpack.c.bf16 %v1110, %v1106
        %v1201 = vpack.c.bf16 %v1112, %v1108
        %v1202 = vpack.c.bf16 %v1120, %v1116
        %v1203 = vpack.c.bf16 %v1122, %v1118
        %v1204 = vpack.c.bf16 %v1130, %v1126
        %v1205 = vpack.c.bf16 %v1132, %v1128
        %v1206 = vpack.c.bf16 %v1140, %v1136
        %v1207 = vpack.c.bf16 %v1142, %v1138
        %v1208 = vpack.c.bf16 %v1150, %v1146
        %v1209 = vpack.c.bf16 %v1152, %v1148
        %v1210 = vpack.c.bf16 %v1160, %v1156
        %v1211 = vpack.c.bf16 %v1162, %v1158
        %v1212 = vld [vmem:[%s419] sm:$0x1]
        %v1214 = vlaneseq
        %v1215 = vshrl.u32 %v1214, 7
        %v1216 = vsub.s32 0, %v1215
        %v1217 = vrot.slane %v1212, %v1216
        %1219 = vmatprep.subr.bf16.mxu0 0
        %1220 = vmatpush1.bf16.xpose.msra.mxu0 %v1180
        %1221 = vmatprep.subr.bf16.mxu0 0
        %1222 = vmatpush1.bf16.xpose.msra.mxu0 %v1182
        %1223 = vmatprep.subr.bf16.mxu0 0
        %1224 = vmatpush1.bf16.xpose.msra.mxu0 %v1184
        %1225 = vmatprep.subr.bf16.mxu0 0
        %1226 = vmatpush1.bf16.xpose.msra.mxu0 %v1186
        %1227 = vmatprep.subr.bf16.mxu0 0
        %1228 = vmatpush1.bf16.xpose.msra.mxu0 %v1188
        %1229 = vmatprep.subr.bf16.mxu0 0
        %1230 = vmatpush1.bf16.xpose.msra.mxu0 %v1190
        %1231 = vmatprep.subr.bf16.mxu0 0
        %1232 = vmatpush1.bf16.xpose.msra.mxu0 %v1192
        %1233 = vmatprep.subr.bf16.mxu0 0
        %1234 = vmatpush1.bf16.xpose.msra.mxu0 %v1194
        %1235 = vmatprep.subr.bf16.mxu0 0
        %1236 = vmatpush1.bf16.xpose.msra.mxu0 0
        %1237 = vmatprep.subr.bf16.mxu0 0
        %1238 = vmatpush1.bf16.xpose.msra.mxu0 0
        %1239 = vmatprep.subr.bf16.mxu0 0
        %1240 = vmatpush1.bf16.xpose.msra.mxu0 0
        %1241 = vmatprep.subr.bf16.mxu0 0
        %1242 = vmatpush1.bf16.xpose.msra.mxu0 0
        %1243 = vmatprep.subr.bf16.mxu0 0
        %1244 = vmatpush1.bf16.xpose.msra.mxu0 0
        %1245 = vmatprep.subr.bf16.mxu0 0
        %1246 = vmatpush1.bf16.xpose.msra.mxu0 0
        %1247 = vmatprep.subr.bf16.mxu0 0
        %1248 = vmatpush1.bf16.xpose.msra.mxu0 0
        %1249 = vmatprep.subr.bf16.mxu0 0
        %1250 = vmatpush1.bf16.xpose.msra.mxu0 0
        %1251 = vmatprep.mubr.bf16.mxu0 0
        %1252 = vmatmul.mubr.bf16.gmra.mrb[0].mxu0 %v1164
        %v1253 = vpop.f32.mrb[0].mxu0
        %v1254 = vadd.f32 %v1217, %v1253
        %v1255 = vpop.f32.mrb[0].mxu0
        %v1256 = vpop.f32.mrb[0].mxu0
        %v1257 = vadd.f32 %v1217, %v1256
        %v1258 = vpop.f32.mrb[0].mxu0
        %1259 = vmatprep.mubr.bf16.mxu0 0
        %1260 = vmatmul.mubr.bf16.gmra.mrb[0].mxu0 %v1166
        %v1261 = vpop.f32.mrb[0].mxu0
        %v1262 = vadd.f32 %v1217, %v1261
        %v1263 = vpop.f32.mrb[0].mxu0
        %v1264 = vpop.f32.mrb[0].mxu0
        %v1265 = vadd.f32 %v1217, %v1264
        %v1266 = vpop.f32.mrb[0].mxu0
        %1267 = vmatprep.mubr.bf16.mxu0 0
        %1268 = vmatmul.mubr.bf16.gmra.mrb[0].mxu0 %v1168
        %v1269 = vpop.f32.mrb[0].mxu0
        %v1270 = vadd.f32 %v1217, %v1269
        %v1271 = vpop.f32.mrb[0].mxu0
        %v1272 = vpop.f32.mrb[0].mxu0
        %v1273 = vadd.f32 %v1217, %v1272
        %v1274 = vpop.f32.mrb[0].mxu0
        %1275 = vmatprep.mubr.bf16.mxu0 0
        %1276 = vmatmul.mubr.bf16.gmra.mrb[0].mxu0 %v1170
        %v1277 = vpop.f32.mrb[0].mxu0
        %v1278 = vadd.f32 %v1217, %v1277
        %v1279 = vpop.f32.mrb[0].mxu0
        %v1280 = vpop.f32.mrb[0].mxu0
        %v1281 = vadd.f32 %v1217, %v1280
        %v1282 = vpop.f32.mrb[0].mxu0
        %1283 = vmatprep.mubr.bf16.mxu0 0
        %1284 = vmatmul.mubr.bf16.gmra.mrb[0].mxu0 %v1172
        %v1285 = vpop.f32.mrb[0].mxu0
        %v1286 = vadd.f32 %v1217, %v1285
        %v1287 = vpop.f32.mrb[0].mxu0
        %v1288 = vpop.f32.mrb[0].mxu0
        %v1289 = vadd.f32 %v1217, %v1288
        %v1290 = vpop.f32.mrb[0].mxu0
        %1291 = vmatprep.mubr.bf16.mxu0 0
        %1292 = vmatmul.mubr.bf16.gmra.mrb[0].mxu0 %v1174
        %v1293 = vpop.f32.mrb[0].mxu0
        %v1294 = vadd.f32 %v1217, %v1293
        %v1295 = vpop.f32.mrb[0].mxu0
        %v1296 = vpop.f32.mrb[0].mxu0
        %v1297 = vadd.f32 %v1217, %v1296
        %v1298 = vpop.f32.mrb[0].mxu0
        %1299 = vmatprep.mubr.bf16.mxu0 0
        %1300 = vmatmul.mubr.bf16.gmra.mrb[0].mxu0 %v1176
        %v1301 = vpop.f32.mrb[0].mxu0
        %v1302 = vadd.f32 %v1217, %v1301
        %v1303 = vpop.f32.mrb[0].mxu0
        %v1304 = vpop.f32.mrb[0].mxu0
        %v1305 = vadd.f32 %v1217, %v1304
        %v1306 = vpop.f32.mrb[0].mxu0
        %1307 = vmatprep.mubr.bf16.mxu0 0
        %1308 = vmatmul.mubr.bf16.gmra.mrb[0].mxu0 %v1178
        %v1309 = vpop.f32.mrb[0].mxu0
        %v1310 = vadd.f32 %v1217, %v1309
        %v1311 = vpop.f32.mrb[0].mxu0
        %v1312 = vpop.f32.mrb[0].mxu0
        %v1313 = vadd.f32 %v1217, %v1312
        %v1314 = vpop.f32.mrb[0].mxu0
        %1315 = vdwg.mxu0
        %1316 = vmax.xlane.f32.xlu0 %v1254
        %v1317 = vpop.xlane.xlu0 %1316
        %1318 = vmax.xlane.f32.xlu0 %v1257
        %v1319 = vpop.xlane.xlu0 %1318
        %1320 = vmax.xlane.f32.xlu0 %v1262
        %v1321 = vpop.xlane.xlu0 %1320
        %1322 = vmax.xlane.f32.xlu0 %v1265
        %v1323 = vpop.xlane.xlu0 %1322
        %1324 = vmax.xlane.f32.xlu0 %v1270
        %v1325 = vpop.xlane.xlu0 %1324
        %1326 = vmax.xlane.f32.xlu0 %v1273
        %v1327 = vpop.xlane.xlu0 %1326
        %1328 = vmax.xlane.f32.xlu0 %v1278
        %v1329 = vpop.xlane.xlu0 %1328
        %1330 = vmax.xlane.f32.xlu0 %v1281
        %v1331 = vpop.xlane.xlu0 %1330
        %1332 = vmax.xlane.f32.xlu0 %v1286
        %v1333 = vpop.xlane.xlu0 %1332
        %1334 = vmax.xlane.f32.xlu0 %v1289
        %v1335 = vpop.xlane.xlu0 %1334
        %1336 = vmax.xlane.f32.xlu0 %v1294
        %v1337 = vpop.xlane.xlu0 %1336
        %1338 = vmax.xlane.f32.xlu0 %v1297
        %v1339 = vpop.xlane.xlu0 %1338
        %1340 = vmax.xlane.f32.xlu0 %v1302
        %v1341 = vpop.xlane.xlu0 %1340
        %1342 = vmax.xlane.f32.xlu0 %v1305
        %v1343 = vpop.xlane.xlu0 %1342
        %1344 = vmax.xlane.f32.xlu0 %v1310
        %v1345 = vpop.xlane.xlu0 %1344
        %1346 = vmax.xlane.f32.xlu0 %v1313
        %v1347 = vpop.xlane.xlu0 %1346
        %v1348 = vsub.f32 %v1254, %v1317
        %v1349 = vsub.f32 %v1257, %v1319
        %v1350 = vsub.f32 %v1262, %v1321
        %v1351 = vsub.f32 %v1265, %v1323
        %v1352 = vsub.f32 %v1270, %v1325
        %v1353 = vsub.f32 %v1273, %v1327
        %v1354 = vsub.f32 %v1278, %v1329
        %v1355 = vsub.f32 %v1281, %v1331
        %v1356 = vsub.f32 %v1286, %v1333
        %v1357 = vsub.f32 %v1289, %v1335
        %v1358 = vsub.f32 %v1294, %v1337
        %v1359 = vsub.f32 %v1297, %v1339
        %v1360 = vsub.f32 %v1302, %v1341
        %v1361 = vsub.f32 %v1305, %v1343
        %v1362 = vsub.f32 %v1310, %v1345
        %v1363 = vsub.f32 %v1313, %v1347
        %v1364 = vmul.f32 %v1348, 1.442695
        %v1365 = vpow.pop %v1364
        %v1366 = vmul.f32 %v1349, 1.442695
        %v1367 = vpow.pop %v1366
        %v1368 = vmul.f32 %v1350, 1.442695
        %v1369 = vpow.pop %v1368
        %v1370 = vmul.f32 %v1351, 1.442695
        %v1371 = vpow.pop %v1370
        %v1372 = vmul.f32 %v1352, 1.442695
        %v1373 = vpow.pop %v1372
        %v1374 = vmul.f32 %v1353, 1.442695
        %v1375 = vpow.pop %v1374
        %v1376 = vmul.f32 %v1354, 1.442695
        %v1377 = vpow.pop %v1376
        %v1378 = vmul.f32 %v1355, 1.442695
        %v1379 = vpow.pop %v1378
        %v1380 = vmul.f32 %v1356, 1.442695
        %v1381 = vpow.pop %v1380
        %v1382 = vmul.f32 %v1357, 1.442695
        %v1383 = vpow.pop %v1382
        %v1384 = vmul.f32 %v1358, 1.442695
        %v1385 = vpow.pop %v1384
        %v1386 = vmul.f32 %v1359, 1.442695
        %v1387 = vpow.pop %v1386
        %v1388 = vmul.f32 %v1360, 1.442695
        %v1389 = vpow.pop %v1388
        %v1390 = vmul.f32 %v1361, 1.442695
        %v1391 = vpow.pop %v1390
        %v1392 = vmul.f32 %v1362, 1.442695
        %v1393 = vpow.pop %v1392
        %v1394 = vmul.f32 %v1363, 1.442695
        %v1395 = vpow.pop %v1394
        %1396 = vadd.xlane.f32.xlu0 %v1365
        %v1397 = vpop.xlane.xlu0 %1396
        %1398 = vadd.xlane.f32.xlu0 %v1367
        %v1399 = vpop.xlane.xlu0 %1398
        %1400 = vadd.xlane.f32.xlu0 %v1369
        %v1401 = vpop.xlane.xlu0 %1400
        %1402 = vadd.xlane.f32.xlu0 %v1371
        %v1403 = vpop.xlane.xlu0 %1402
        %1404 = vadd.xlane.f32.xlu0 %v1373
        %v1405 = vpop.xlane.xlu0 %1404
        %1406 = vadd.xlane.f32.xlu0 %v1375
        %v1407 = vpop.xlane.xlu0 %1406
        %1408 = vadd.xlane.f32.xlu0 %v1377
        %v1409 = vpop.xlane.xlu0 %1408
        %1410 = vadd.xlane.f32.xlu0 %v1379
        %v1411 = vpop.xlane.xlu0 %1410
        %1412 = vadd.xlane.f32.xlu0 %v1381
        %v1413 = vpop.xlane.xlu0 %1412
        %1414 = vadd.xlane.f32.xlu0 %v1383
        %v1415 = vpop.xlane.xlu0 %1414
        %1416 = vadd.xlane.f32.xlu0 %v1385
        %v1417 = vpop.xlane.xlu0 %1416
        %1418 = vadd.xlane.f32.xlu0 %v1387
        %v1419 = vpop.xlane.xlu0 %1418
        %1420 = vadd.xlane.f32.xlu0 %v1389
        %v1421 = vpop.xlane.xlu0 %1420
        %1422 = vadd.xlane.f32.xlu0 %v1391
        %v1423 = vpop.xlane.xlu0 %1422
        %1424 = vadd.xlane.f32.xlu0 %v1393
        %v1425 = vpop.xlane.xlu0 %1424
        %1426 = vadd.xlane.f32.xlu0 %v1395
        %v1427 = vpop.xlane.xlu0 %1426
        %v1428 = vrcp.pop %v1397
        %v1429 = vrcp.pop %v1399
        %v1430 = vrcp.pop %v1401
        %v1431 = vrcp.pop %v1403
        %v1432 = vrcp.pop %v1405
        %v1433 = vrcp.pop %v1407
        %v1434 = vrcp.pop %v1409
        %v1435 = vrcp.pop %v1411
        %v1436 = vrcp.pop %v1413
        %v1437 = vrcp.pop %v1415
        %v1438 = vrcp.pop %v1417
        %v1439 = vrcp.pop %v1419
        %v1440 = vrcp.pop %v1421
        %v1441 = vrcp.pop %v1423
        %v1442 = vrcp.pop %v1425
        %v1443 = vrcp.pop %v1427
        %v1444 = vmul.f32 %v1365, %v1428
        %v1445 = vmul.f32 %v1367, %v1429
        %v1446 = vmul.f32 %v1369, %v1430
        %v1447 = vmul.f32 %v1371, %v1431
        %v1448 = vmul.f32 %v1373, %v1432
        %v1449 = vmul.f32 %v1375, %v1433
        %v1450 = vmul.f32 %v1377, %v1434
        %v1451 = vmul.f32 %v1379, %v1435
        %v1452 = vmul.f32 %v1381, %v1436
        %v1453 = vmul.f32 %v1383, %v1437
        %v1454 = vmul.f32 %v1385, %v1438
        %v1455 = vmul.f32 %v1387, %v1439
        %v1456 = vmul.f32 %v1389, %v1440
        %v1457 = vmul.f32 %v1391, %v1441
        %v1458 = vmul.f32 %v1393, %v1442
        %v1459 = vmul.f32 %v1395, %v1443
        %1460 = vst [vmem:[%s416] sm:$0xff] %v1444
        %1461 = vst [vmem:[%s416 + $0x8] sm:$0xff] %v1445
        %1462 = vst [vmem:[%s416 + $0x10] sm:$0xff] %v1446
        %1463 = vst [vmem:[%s416 + $0x18] sm:$0xff] %v1447
        %1464 = vst [vmem:[%s416 + $0x20] sm:$0xff] %v1448
        %1465 = vst [vmem:[%s416 + $0x28] sm:$0xff] %v1449
        %1466 = vst [vmem:[%s416 + $0x30] sm:$0xff] %v1450
        %1467 = vst [vmem:[%s416 + $0x38] sm:$0xff] %v1451
        %1468 = vst [vmem:[%s416 + $0x40] sm:$0xff] %v1452
        %1469 = vst [vmem:[%s416 + $0x48] sm:$0xff] %v1453
        %1470 = vst [vmem:[%s416 + $0x50] sm:$0xff] %v1454
        %1471 = vst [vmem:[%s416 + $0x58] sm:$0xff] %v1455
        %1472 = vst [vmem:[%s416 + $0x60] sm:$0xff] %v1456
        %1473 = vst [vmem:[%s416 + $0x68] sm:$0xff] %v1457
        %1474 = vst [vmem:[%s416 + $0x70] sm:$0xff] %v1458
        %1475 = vst [vmem:[%s416 + $0x78] sm:$0xff] %v1459
        %v1476 = vpack.c.bf16 %v1445, %v1444
        %v1477 = vpack.c.bf16 %v1447, %v1446
        %v1478 = vpack.c.bf16 %v1449, %v1448
        %v1479 = vpack.c.bf16 %v1451, %v1450
        %v1480 = vpack.c.bf16 %v1453, %v1452
        %v1481 = vpack.c.bf16 %v1455, %v1454
        %v1482 = vpack.c.bf16 %v1457, %v1456
        %v1483 = vpack.c.bf16 %v1459, %v1458
        %1484 = vmatprep.subr.bf16.mxu0 0
        %1485 = vmatpush1.bf16.msra.mxu0 %v1196
        %1486 = vmatprep.subr.bf16.mxu0 0
        %1487 = vmatpush1.bf16.msra.mxu0 %v1198
        %1488 = vmatprep.subr.bf16.mxu0 0
        %1489 = vmatpush1.bf16.msra.mxu0 %v1200
        %1490 = vmatprep.subr.bf16.mxu0 0
        %1491 = vmatpush1.bf16.msra.mxu0 %v1202
        %1492 = vmatprep.subr.bf16.mxu0 0
        %1493 = vmatpush1.bf16.msra.mxu0 %v1204
        %1494 = vmatprep.subr.bf16.mxu0 0
        %1495 = vmatpush1.bf16.msra.mxu0 %v1206
        %1496 = vmatprep.subr.bf16.mxu0 0
        %1497 = vmatpush1.bf16.msra.mxu0 %v1208
        %1498 = vmatprep.subr.bf16.mxu0 0
        %1499 = vmatpush1.bf16.msra.mxu0 %v1210
        %1500 = vmatprep.subr.bf16.mxu0 0
        %1501 = vmatpush1.bf16.msra.mxu0 0
        %1502 = vmatprep.subr.bf16.mxu0 0
        %1503 = vmatpush1.bf16.msra.mxu0 0
        %1504 = vmatprep.subr.bf16.mxu0 0
        %1505 = vmatpush1.bf16.msra.mxu0 0
        %1506 = vmatprep.subr.bf16.mxu0 0
        %1507 = vmatpush1.bf16.msra.mxu0 0
        %1508 = vmatprep.subr.bf16.mxu0 0
        %1509 = vmatpush1.bf16.msra.mxu0 0
        %1510 = vmatprep.subr.bf16.mxu0 0
        %1511 = vmatpush1.bf16.msra.mxu0 0
        %1512 = vmatprep.subr.bf16.mxu0 0
        %1513 = vmatpush1.bf16.msra.mxu0 0
        %1514 = vmatprep.subr.bf16.mxu0 0
        %1515 = vmatpush1.bf16.msra.mxu0 0
        %1516 = vmatprep.mubr.bf16.mxu0 0
        %1517 = vmatmul.mubr.bf16.gmra.mrb[0].mxu0 %v1476
        %v1518 = vpop.f32.mrb[0].mxu0
        %v1519 = vadd.f32 0.0, %v1518
        %v1520 = vpop.f32.mrb[0].mxu0
        %v1521 = vpop.f32.mrb[0].mxu0
        %v1522 = vadd.f32 0.0, %v1521
        %v1523 = vpop.f32.mrb[0].mxu0
        %1524 = vmatprep.mubr.bf16.mxu0 0
        %1525 = vmatmul.mubr.bf16.gmra.mrb[0].mxu0 %v1477
        %v1526 = vpop.f32.mrb[0].mxu0
        %v1527 = vadd.f32 0.0, %v1526
        %v1528 = vpop.f32.mrb[0].mxu0
        %v1529 = vpop.f32.mrb[0].mxu0
        %v1530 = vadd.f32 0.0, %v1529
        %v1531 = vpop.f32.mrb[0].mxu0
        %1532 = vmatprep.mubr.bf16.mxu0 0
        %1533 = vmatmul.mubr.bf16.gmra.mrb[0].mxu0 %v1478
        %v1534 = vpop.f32.mrb[0].mxu0
        %v1535 = vadd.f32 0.0, %v1534
        %v1536 = vpop.f32.mrb[0].mxu0
        %v1537 = vpop.f32.mrb[0].mxu0
        %v1538 = vadd.f32 0.0, %v1537
        %v1539 = vpop.f32.mrb[0].mxu0
        %1540 = vmatprep.mubr.bf16.mxu0 0
        %1541 = vmatmul.mubr.bf16.gmra.mrb[0].mxu0 %v1479
        %v1542 = vpop.f32.mrb[0].mxu0
        %v1543 = vadd.f32 0.0, %v1542
        %v1544 = vpop.f32.mrb[0].mxu0
        %v1545 = vpop.f32.mrb[0].mxu0
        %v1546 = vadd.f32 0.0, %v1545
        %v1547 = vpop.f32.mrb[0].mxu0
        %1548 = vmatprep.mubr.bf16.mxu0 0
        %1549 = vmatmul.mubr.bf16.gmra.mrb[0].mxu0 %v1480
        %v1550 = vpop.f32.mrb[0].mxu0
        %v1551 = vadd.f32 0.0, %v1550
        %v1552 = vpop.f32.mrb[0].mxu0
        %v1553 = vpop.f32.mrb[0].mxu0
        %v1554 = vadd.f32 0.0, %v1553
        %v1555 = vpop.f32.mrb[0].mxu0
        %1556 = vmatprep.mubr.bf16.mxu0 0
        %1557 = vmatmul.mubr.bf16.gmra.mrb[0].mxu0 %v1481
        %v1558 = vpop.f32.mrb[0].mxu0
        %v1559 = vadd.f32 0.0, %v1558
        %v1560 = vpop.f32.mrb[0].mxu0
        %v1561 = vpop.f32.mrb[0].mxu0
        %v1562 = vadd.f32 0.0, %v1561
        %v1563 = vpop.f32.mrb[0].mxu0
        %1564 = vmatprep.mubr.bf16.mxu0 0
        %1565 = vmatmul.mubr.bf16.gmra.mrb[0].mxu0 %v1482
        %v1566 = vpop.f32.mrb[0].mxu0
        %v1567 = vadd.f32 0.0, %v1566
        %v1568 = vpop.f32.mrb[0].mxu0
        %v1569 = vpop.f32.mrb[0].mxu0
        %v1570 = vadd.f32 0.0, %v1569
        %v1571 = vpop.f32.mrb[0].mxu0
        %1572 = vmatprep.mubr.bf16.mxu0 0
        %1573 = vmatmul.mubr.bf16.gmra.mrb[0].mxu0 %v1483
        %v1574 = vpop.f32.mrb[0].mxu0
        %v1575 = vadd.f32 0.0, %v1574
        %v1576 = vpop.f32.mrb[0].mxu0
        %v1577 = vpop.f32.mrb[0].mxu0
        %v1578 = vadd.f32 0.0, %v1577
        %v1579 = vpop.f32.mrb[0].mxu0
        %1580 = vdwg.mxu0
        %1581 = vmatprep.subr.bf16.mxu0 0
        %1582 = vmatpush1.bf16.xpose.msra.mxu0 %v1181
        %1583 = vmatprep.subr.bf16.mxu0 0
        %1584 = vmatpush1.bf16.xpose.msra.mxu0 %v1183
        %1585 = vmatprep.subr.bf16.mxu0 0
        %1586 = vmatpush1.bf16.xpose.msra.mxu0 %v1185
        %1587 = vmatprep.subr.bf16.mxu0 0
        %1588 = vmatpush1.bf16.xpose.msra.mxu0 %v1187
        %1589 = vmatprep.subr.bf16.mxu0 0
        %1590 = vmatpush1.bf16.xpose.msra.mxu0 %v1189
        %1591 = vmatprep.subr.bf16.mxu0 0
        %1592 = vmatpush1.bf16.xpose.msra.mxu0 %v1191
        %1593 = vmatprep.subr.bf16.mxu0 0
        %1594 = vmatpush1.bf16.xpose.msra.mxu0 %v1193
        %1595 = vmatprep.subr.bf16.mxu0 0
        %1596 = vmatpush1.bf16.xpose.msra.mxu0 %v1195
        %1597 = vmatprep.subr.bf16.mxu0 0
        %1598 = vmatpush1.bf16.xpose.msra.mxu0 0
        %1599 = vmatprep.subr.bf16.mxu0 0
        %1600 = vmatpush1.bf16.xpose.msra.mxu0 0
        %1601 = vmatprep.subr.bf16.mxu0 0
        %1602 = vmatpush1.bf16.xpose.msra.mxu0 0
        %1603 = vmatprep.subr.bf16.mxu0 0
        %1604 = vmatpush1.bf16.xpose.msra.mxu0 0
        %1605 = vmatprep.subr.bf16.mxu0 0
        %1606 = vmatpush1.bf16.xpose.msra.mxu0 0
        %1607 = vmatprep.subr.bf16.mxu0 0
        %1608 = vmatpush1.bf16.xpose.msra.mxu0 0
        %1609 = vmatprep.subr.bf16.mxu0 0
        %1610 = vmatpush1.bf16.xpose.msra.mxu0 0
        %1611 = vmatprep.subr.bf16.mxu0 0
        %1612 = vmatpush1.bf16.xpose.msra.mxu0 0
        %1613 = vmatprep.mubr.bf16.mxu0 0
        %1614 = vmatmul.mubr.bf16.gmra.mrb[0].mxu0 %v1165
        %v1615 = vpop.f32.mrb[0].mxu0
        %v1616 = vadd.f32 %v1217, %v1615
        %v1617 = vpop.f32.mrb[0].mxu0
        %v1618 = vpop.f32.mrb[0].mxu0
        %v1619 = vadd.f32 %v1217, %v1618
        %v1620 = vpop.f32.mrb[0].mxu0
        %1621 = vmatprep.mubr.bf16.mxu0 0
        %1622 = vmatmul.mubr.bf16.gmra.mrb[0].mxu0 %v1167
        %v1623 = vpop.f32.mrb[0].mxu0
        %v1624 = vadd.f32 %v1217, %v1623
        %v1625 = vpop.f32.mrb[0].mxu0
        %v1626 = vpop.f32.mrb[0].mxu0
        %v1627 = vadd.f32 %v1217, %v1626
        %v1628 = vpop.f32.mrb[0].mxu0
        %1629 = vmatprep.mubr.bf16.mxu0 0
        %1630 = vmatmul.mubr.bf16.gmra.mrb[0].mxu0 %v1169
        %v1631 = vpop.f32.mrb[0].mxu0
        %v1632 = vadd.f32 %v1217, %v1631
        %v1633 = vpop.f32.mrb[0].mxu0
        %v1634 = vpop.f32.mrb[0].mxu0
        %v1635 = vadd.f32 %v1217, %v1634
        %v1636 = vpop.f32.mrb[0].mxu0
        %1637 = vmatprep.mubr.bf16.mxu0 0
        %1638 = vmatmul.mubr.bf16.gmra.mrb[0].mxu0 %v1171
        %v1639 = vpop.f32.mrb[0].mxu0
        %v1640 = vadd.f32 %v1217, %v1639
        %v1641 = vpop.f32.mrb[0].mxu0
        %v1642 = vpop.f32.mrb[0].mxu0
        %v1643 = vadd.f32 %v1217, %v1642
        %v1644 = vpop.f32.mrb[0].mxu0
        %1645 = vmatprep.mubr.bf16.mxu0 0
        %1646 = vmatmul.mubr.bf16.gmra.mrb[0].mxu0 %v1173
        %v1647 = vpop.f32.mrb[0].mxu0
        %v1648 = vadd.f32 %v1217, %v1647
        %v1649 = vpop.f32.mrb[0].mxu0
        %v1650 = vpop.f32.mrb[0].mxu0
        %v1651 = vadd.f32 %v1217, %v1650
        %v1652 = vpop.f32.mrb[0].mxu0
        %1653 = vmatprep.mubr.bf16.mxu0 0
        %1654 = vmatmul.mubr.bf16.gmra.mrb[0].mxu0 %v1175
        %v1655 = vpop.f32.mrb[0].mxu0
        %v1656 = vadd.f32 %v1217, %v1655
        %v1657 = vpop.f32.mrb[0].mxu0
        %v1658 = vpop.f32.mrb[0].mxu0
        %v1659 = vadd.f32 %v1217, %v1658
        %v1660 = vpop.f32.mrb[0].mxu0
        %1661 = vmatprep.mubr.bf16.mxu0 0
        %1662 = vmatmul.mubr.bf16.gmra.mrb[0].mxu0 %v1177
        %v1663 = vpop.f32.mrb[0].mxu0
        %v1664 = vadd.f32 %v1217, %v1663
        %v1665 = vpop.f32.mrb[0].mxu0
        %v1666 = vpop.f32.mrb[0].mxu0
        %v1667 = vadd.f32 %v1217, %v1666
        %v1668 = vpop.f32.mrb[0].mxu0
        %1669 = vmatprep.mubr.bf16.mxu0 0
        %1670 = vmatmul.mubr.bf16.gmra.mrb[0].mxu0 %v1179
        %v1671 = vpop.f32.mrb[0].mxu0
        %v1672 = vadd.f32 %v1217, %v1671
        %v1673 = vpop.f32.mrb[0].mxu0
        %v1674 = vpop.f32.mrb[0].mxu0
        %v1675 = vadd.f32 %v1217, %v1674
        %v1676 = vpop.f32.mrb[0].mxu0
        %1677 = vdwg.mxu0
        %1678 = vmax.xlane.f32.xlu0 %v1616
        %v1679 = vpop.xlane.xlu0 %1678
        %1680 = vmax.xlane.f32.xlu0 %v1619
        %v1681 = vpop.xlane.xlu0 %1680
        %1682 = vmax.xlane.f32.xlu0 %v1624
        %v1683 = vpop.xlane.xlu0 %1682
        %1684 = vmax.xlane.f32.xlu0 %v1627
        %v1685 = vpop.xlane.xlu0 %1684
        %1686 = vmax.xlane.f32.xlu0 %v1632
        %v1687 = vpop.xlane.xlu0 %1686
        %1688 = vmax.xlane.f32.xlu0 %v1635
        %v1689 = vpop.xlane.xlu0 %1688
        %1690 = vmax.xlane.f32.xlu0 %v1640
        %v1691 = vpop.xlane.xlu0 %1690
        %1692 = vmax.xlane.f32.xlu0 %v1643
        %v1693 = vpop.xlane.xlu0 %1692
        %1694 = vmax.xlane.f32.xlu0 %v1648
        %v1695 = vpop.xlane.xlu0 %1694
        %1696 = vmax.xlane.f32.xlu0 %v1651
        %v1697 = vpop.xlane.xlu0 %1696
        %1698 = vmax.xlane.f32.xlu0 %v1656
        %v1699 = vpop.xlane.xlu0 %1698
        %1700 = vmax.xlane.f32.xlu0 %v1659
        %v1701 = vpop.xlane.xlu0 %1700
        %1702 = vmax.xlane.f32.xlu0 %v1664
        %v1703 = vpop.xlane.xlu0 %1702
        %1704 = vmax.xlane.f32.xlu0 %v1667
        %v1705 = vpop.xlane.xlu0 %1704
        %1706 = vmax.xlane.f32.xlu0 %v1672
        %v1707 = vpop.xlane.xlu0 %1706
        %1708 = vmax.xlane.f32.xlu0 %v1675
        %v1709 = vpop.xlane.xlu0 %1708
        %v1710 = vsub.f32 %v1616, %v1679
        %v1711 = vsub.f32 %v1619, %v1681
        %v1712 = vsub.f32 %v1624, %v1683
        %v1713 = vsub.f32 %v1627, %v1685
        %v1714 = vsub.f32 %v1632, %v1687
        %v1715 = vsub.f32 %v1635, %v1689
        %v1716 = vsub.f32 %v1640, %v1691
        %v1717 = vsub.f32 %v1643, %v1693
        %v1718 = vsub.f32 %v1648, %v1695
        %v1719 = vsub.f32 %v1651, %v1697
        %v1720 = vsub.f32 %v1656, %v1699
        %v1721 = vsub.f32 %v1659, %v1701
        %v1722 = vsub.f32 %v1664, %v1703
        %v1723 = vsub.f32 %v1667, %v1705
        %v1724 = vsub.f32 %v1672, %v1707
        %v1725 = vsub.f32 %v1675, %v1709
        %v1726 = vmul.f32 %v1710, 1.442695
        %v1727 = vpow.pop %v1726
        %v1728 = vmul.f32 %v1711, 1.442695
        %v1729 = vpow.pop %v1728
        %v1730 = vmul.f32 %v1712, 1.442695
        %v1731 = vpow.pop %v1730
        %v1732 = vmul.f32 %v1713, 1.442695
        %v1733 = vpow.pop %v1732
        %v1734 = vmul.f32 %v1714, 1.442695
        %v1735 = vpow.pop %v1734
        %v1736 = vmul.f32 %v1715, 1.442695
        %v1737 = vpow.pop %v1736
        %v1738 = vmul.f32 %v1716, 1.442695
        %v1739 = vpow.pop %v1738
        %v1740 = vmul.f32 %v1717, 1.442695
        %v1741 = vpow.pop %v1740
        %v1742 = vmul.f32 %v1718, 1.442695
        %v1743 = vpow.pop %v1742
        %v1744 = vmul.f32 %v1719, 1.442695
        %v1745 = vpow.pop %v1744
        %v1746 = vmul.f32 %v1720, 1.442695
        %v1747 = vpow.pop %v1746
        %v1748 = vmul.f32 %v1721, 1.442695
        %v1749 = vpow.pop %v1748
        %v1750 = vmul.f32 %v1722, 1.442695
        %v1751 = vpow.pop %v1750
        %v1752 = vmul.f32 %v1723, 1.442695
        %v1753 = vpow.pop %v1752
        %v1754 = vmul.f32 %v1724, 1.442695
        %v1755 = vpow.pop %v1754
        %v1756 = vmul.f32 %v1725, 1.442695
        %v1757 = vpow.pop %v1756
        %1758 = vadd.xlane.f32.xlu0 %v1727
        %v1759 = vpop.xlane.xlu0 %1758
        %1760 = vadd.xlane.f32.xlu0 %v1729
        %v1761 = vpop.xlane.xlu0 %1760
        %1762 = vadd.xlane.f32.xlu0 %v1731
        %v1763 = vpop.xlane.xlu0 %1762
        %1764 = vadd.xlane.f32.xlu0 %v1733
        %v1765 = vpop.xlane.xlu0 %1764
        %1766 = vadd.xlane.f32.xlu0 %v1735
        %v1767 = vpop.xlane.xlu0 %1766
        %1768 = vadd.xlane.f32.xlu0 %v1737
        %v1769 = vpop.xlane.xlu0 %1768
        %1770 = vadd.xlane.f32.xlu0 %v1739
        %v1771 = vpop.xlane.xlu0 %1770
        %1772 = vadd.xlane.f32.xlu0 %v1741
        %v1773 = vpop.xlane.xlu0 %1772
        %1774 = vadd.xlane.f32.xlu0 %v1743
        %v1775 = vpop.xlane.xlu0 %1774
        %1776 = vadd.xlane.f32.xlu0 %v1745
        %v1777 = vpop.xlane.xlu0 %1776
        %1778 = vadd.xlane.f32.xlu0 %v1747
        %v1779 = vpop.xlane.xlu0 %1778
        %1780 = vadd.xlane.f32.xlu0 %v1749
        %v1781 = vpop.xlane.xlu0 %1780
        %1782 = vadd.xlane.f32.xlu0 %v1751
        %v1783 = vpop.xlane.xlu0 %1782
        %1784 = vadd.xlane.f32.xlu0 %v1753
        %v1785 = vpop.xlane.xlu0 %1784
        %1786 = vadd.xlane.f32.xlu0 %v1755
        %v1787 = vpop.xlane.xlu0 %1786
        %1788 = vadd.xlane.f32.xlu0 %v1757
        %v1789 = vpop.xlane.xlu0 %1788
        %v1790 = vrcp.pop %v1759
        %v1791 = vrcp.pop %v1761
        %v1792 = vrcp.pop %v1763
        %v1793 = vrcp.pop %v1765
        %v1794 = vrcp.pop %v1767
        %v1795 = vrcp.pop %v1769
        %v1796 = vrcp.pop %v1771
        %v1797 = vrcp.pop %v1773
        %v1798 = vrcp.pop %v1775
        %v1799 = vrcp.pop %v1777
        %v1800 = vrcp.pop %v1779
        %v1801 = vrcp.pop %v1781
        %v1802 = vrcp.pop %v1783
        %v1803 = vrcp.pop %v1785
        %v1804 = vrcp.pop %v1787
        %v1805 = vrcp.pop %v1789
        %v1806 = vmul.f32 %v1727, %v1790
        %v1807 = vmul.f32 %v1729, %v1791
        %v1808 = vmul.f32 %v1731, %v1792
        %v1809 = vmul.f32 %v1733, %v1793
        %v1810 = vmul.f32 %v1735, %v1794
        %v1811 = vmul.f32 %v1737, %v1795
        %v1812 = vmul.f32 %v1739, %v1796
        %v1813 = vmul.f32 %v1741, %v1797
        %v1814 = vmul.f32 %v1743, %v1798
        %v1815 = vmul.f32 %v1745, %v1799
        %v1816 = vmul.f32 %v1747, %v1800
        %v1817 = vmul.f32 %v1749, %v1801
        %v1818 = vmul.f32 %v1751, %v1802
        %v1819 = vmul.f32 %v1753, %v1803
        %v1820 = vmul.f32 %v1755, %v1804
        %v1821 = vmul.f32 %v1757, %v1805
        %s1822 = scalar_lea.vmem %s416, 128 [#allocation11]
        %1823 = vst [vmem:[%s1822] sm:$0xff] %v1806
        %1824 = vst [vmem:[%s1822 + $0x8] sm:$0xff] %v1807
        %1825 = vst [vmem:[%s1822 + $0x10] sm:$0xff] %v1808
        %1826 = vst [vmem:[%s1822 + $0x18] sm:$0xff] %v1809
        %1827 = vst [vmem:[%s1822 + $0x20] sm:$0xff] %v1810
        %1828 = vst [vmem:[%s1822 + $0x28] sm:$0xff] %v1811
        %1829 = vst [vmem:[%s1822 + $0x30] sm:$0xff] %v1812
        %1830 = vst [vmem:[%s1822 + $0x38] sm:$0xff] %v1813
        %1831 = vst [vmem:[%s1822 + $0x40] sm:$0xff] %v1814
        %1832 = vst [vmem:[%s1822 + $0x48] sm:$0xff] %v1815
        %1833 = vst [vmem:[%s1822 + $0x50] sm:$0xff] %v1816
        %1834 = vst [vmem:[%s1822 + $0x58] sm:$0xff] %v1817
        %1835 = vst [vmem:[%s1822 + $0x60] sm:$0xff] %v1818
        %1836 = vst [vmem:[%s1822 + $0x68] sm:$0xff] %v1819
        %1837 = vst [vmem:[%s1822 + $0x70] sm:$0xff] %v1820
        %1838 = vst [vmem:[%s1822 + $0x78] sm:$0xff] %v1821
        %v1839 = vpack.c.bf16 %v1807, %v1806
        %v1840 = vpack.c.bf16 %v1809, %v1808
        %v1841 = vpack.c.bf16 %v1811, %v1810
        %v1842 = vpack.c.bf16 %v1813, %v1812
        %v1843 = vpack.c.bf16 %v1815, %v1814
        %v1844 = vpack.c.bf16 %v1817, %v1816
        %v1845 = vpack.c.bf16 %v1819, %v1818
        %v1846 = vpack.c.bf16 %v1821, %v1820
        %1847 = vmatprep.subr.bf16.mxu0 0
        %1848 = vmatpush1.bf16.msra.mxu0 %v1197
        %1849 = vmatprep.subr.bf16.mxu0 0
        %1850 = vmatpush1.bf16.msra.mxu0 %v1199
        %1851 = vmatprep.subr.bf16.mxu0 0
        %1852 = vmatpush1.bf16.msra.mxu0 %v1201
        %1853 = vmatprep.subr.bf16.mxu0 0
        %1854 = vmatpush1.bf16.msra.mxu0 %v1203
        %1855 = vmatprep.subr.bf16.mxu0 0
        %1856 = vmatpush1.bf16.msra.mxu0 %v1205
        %1857 = vmatprep.subr.bf16.mxu0 0
        %1858 = vmatpush1.bf16.msra.mxu0 %v1207
        %1859 = vmatprep.subr.bf16.mxu0 0
        %1860 = vmatpush1.bf16.msra.mxu0 %v1209
        %1861 = vmatprep.subr.bf16.mxu0 0
        %1862 = vmatpush1.bf16.msra.mxu0 %v1211
        %1863 = vmatprep.subr.bf16.mxu0 0
        %1864 = vmatpush1.bf16.msra.mxu0 0
        %1865 = vmatprep.subr.bf16.mxu0 0
        %1866 = vmatpush1.bf16.msra.mxu0 0
        %1867 = vmatprep.subr.bf16.mxu0 0
        %1868 = vmatpush1.bf16.msra.mxu0 0
        %1869 = vmatprep.subr.bf16.mxu0 0
        %1870 = vmatpush1.bf16.msra.mxu0 0
        %1871 = vmatprep.subr.bf16.mxu0 0
        %1872 = vmatpush1.bf16.msra.mxu0 0
        %1873 = vmatprep.subr.bf16.mxu0 0
        %1874 = vmatpush1.bf16.msra.mxu0 0
        %1875 = vmatprep.subr.bf16.mxu0 0
        %1876 = vmatpush1.bf16.msra.mxu0 0
        %1877 = vmatprep.subr.bf16.mxu0 0
        %1878 = vmatpush1.bf16.msra.mxu0 0
        %1879 = vmatprep.mubr.bf16.mxu0 0
        %1880 = vmatmul.mubr.bf16.gmra.mrb[0].mxu0 %v1839
        %v1881 = vpop.f32.mrb[0].mxu0
        %v1882 = vadd.f32 0.0, %v1881
        %v1883 = vpop.f32.mrb[0].mxu0
        %v1884 = vpop.f32.mrb[0].mxu0
        %v1885 = vadd.f32 0.0, %v1884
        %v1886 = vpop.f32.mrb[0].mxu0
        %1887 = vmatprep.mubr.bf16.mxu0 0
        %1888 = vmatmul.mubr.bf16.gmra.mrb[0].mxu0 %v1840
        %v1889 = vpop.f32.mrb[0].mxu0
        %v1890 = vadd.f32 0.0, %v1889
        %v1891 = vpop.f32.mrb[0].mxu0
        %v1892 = vpop.f32.mrb[0].mxu0
        %v1893 = vadd.f32 0.0, %v1892
        %v1894 = vpop.f32.mrb[0].mxu0
        %1895 = vmatprep.mubr.bf16.mxu0 0
        %1896 = vmatmul.mubr.bf16.gmra.mrb[0].mxu0 %v1841
        %v1897 = vpop.f32.mrb[0].mxu0
        %v1898 = vadd.f32 0.0, %v1897
        %v1899 = vpop.f32.mrb[0].mxu0
        %v1900 = vpop.f32.mrb[0].mxu0
        %v1901 = vadd.f32 0.0, %v1900
        %v1902 = vpop.f32.mrb[0].mxu0
        %1903 = vmatprep.mubr.bf16.mxu0 0
        %1904 = vmatmul.mubr.bf16.gmra.mrb[0].mxu0 %v1842
        %v1905 = vpop.f32.mrb[0].mxu0
        %v1906 = vadd.f32 0.0, %v1905
        %v1907 = vpop.f32.mrb[0].mxu0
        %v1908 = vpop.f32.mrb[0].mxu0
        %v1909 = vadd.f32 0.0, %v1908
        %v1910 = vpop.f32.mrb[0].mxu0
        %1911 = vmatprep.mubr.bf16.mxu0 0
        %1912 = vmatmul.mubr.bf16.gmra.mrb[0].mxu0 %v1843
        %v1913 = vpop.f32.mrb[0].mxu0
        %v1914 = vadd.f32 0.0, %v1913
        %v1915 = vpop.f32.mrb[0].mxu0
        %v1916 = vpop.f32.mrb[0].mxu0
        %v1917 = vadd.f32 0.0, %v1916
        %v1918 = vpop.f32.mrb[0].mxu0
        %1919 = vmatprep.mubr.bf16.mxu0 0
        %1920 = vmatmul.mubr.bf16.gmra.mrb[0].mxu0 %v1844
        %v1921 = vpop.f32.mrb[0].mxu0
        %v1922 = vadd.f32 0.0, %v1921
        %v1923 = vpop.f32.mrb[0].mxu0
        %v1924 = vpop.f32.mrb[0].mxu0
        %v1925 = vadd.f32 0.0, %v1924
        %v1926 = vpop.f32.mrb[0].mxu0
        %1927 = vmatprep.mubr.bf16.mxu0 0
        %1928 = vmatmul.mubr.bf16.gmra.mrb[0].mxu0 %v1845
        %v1929 = vpop.f32.mrb[0].mxu0
        %v1930 = vadd.f32 0.0, %v1929
        %v1931 = vpop.f32.mrb[0].mxu0
        %v1932 = vpop.f32.mrb[0].mxu0
        %v1933 = vadd.f32 0.0, %v1932
        %v1934 = vpop.f32.mrb[0].mxu0
        %1935 = vmatprep.mubr.bf16.mxu0 0
        %1936 = vmatmul.mubr.bf16.gmra.mrb[0].mxu0 %v1846
        %v1937 = vpop.f32.mrb[0].mxu0
        %v1938 = vadd.f32 0.0, %v1937
        %v1939 = vpop.f32.mrb[0].mxu0
        %v1940 = vpop.f32.mrb[0].mxu0
        %v1941 = vadd.f32 0.0, %v1940
        %v1942 = vpop.f32.mrb[0].mxu0
        %1943 = vdwg.mxu0
        %1944 = vst [vmem:[%s409] sm:$0xff] %v1519
        %1945 = vst [vmem:[%s409 + $0x8] sm:$0xff] %v1882
        %1946 = vst [vmem:[%s409 + $0x10] sm:$0xff] %v1522
        %1947 = vst [vmem:[%s409 + $0x18] sm:$0xff] %v1885
        %1948 = vst [vmem:[%s409 + $0x20] sm:$0xff] %v1527
        %1949 = vst [vmem:[%s409 + $0x28] sm:$0xff] %v1890
        %1950 = vst [vmem:[%s409 + $0x30] sm:$0xff] %v1530
        %1951 = vst [vmem:[%s409 + $0x38] sm:$0xff] %v1893
        %1952 = vst [vmem:[%s409 + $0x40] sm:$0xff] %v1535
        %1953 = vst [vmem:[%s409 + $0x48] sm:$0xff] %v1898
        %1954 = vst [vmem:[%s409 + $0x50] sm:$0xff] %v1538
        %1955 = vst [vmem:[%s409 + $0x58] sm:$0xff] %v1901
        %1956 = vst [vmem:[%s409 + $0x60] sm:$0xff] %v1543
        %1957 = vst [vmem:[%s409 + $0x68] sm:$0xff] %v1906
        %1958 = vst [vmem:[%s409 + $0x70] sm:$0xff] %v1546
        %1959 = vst [vmem:[%s409 + $0x78] sm:$0xff] %v1909
        %1960 = vst [vmem:[%s409 + $0x80] sm:$0xff] %v1551
        %1961 = vst [vmem:[%s409 + $0x88] sm:$0xff] %v1914
        %1962 = vst [vmem:[%s409 + $0x90] sm:$0xff] %v1554
        %1963 = vst [vmem:[%s409 + $0x98] sm:$0xff] %v1917
        %1964 = vst [vmem:[%s409 + $0xa0] sm:$0xff] %v1559
        %1965 = vst [vmem:[%s409 + $0xa8] sm:$0xff] %v1922
        %1966 = vst [vmem:[%s409 + $0xb0] sm:$0xff] %v1562
        %1967 = vst [vmem:[%s409 + $0xb8] sm:$0xff] %v1925
        %1968 = vst [vmem:[%s409 + $0xc0] sm:$0xff] %v1567
        %1969 = vst [vmem:[%s409 + $0xc8] sm:$0xff] %v1930
        %1970 = vst [vmem:[%s409 + $0xd0] sm:$0xff] %v1570
        %1971 = vst [vmem:[%s409 + $0xd8] sm:$0xff] %v1933
        %1972 = vst [vmem:[%s409 + $0xe0] sm:$0xff] %v1575
        %1973 = vst [vmem:[%s409 + $0xe8] sm:$0xff] %v1938
        %1974 = vst [vmem:[%s409 + $0xf0] sm:$0xff] %v1578
        %1975 = vst [vmem:[%s409 + $0xf8] sm:$0xff] %v1941
        %s1976 = sand.u32 %s218, 1
        %s1977 = scalar_lea.sflag [#allocation4], %s1976
        %s1978 = sand.u32 %s218, 1
        %s1979 = smul.addr %s1978, 256
        %s1980 = scalar_lea.vmem [#allocation10], %s1979
        %s1981 = sand.u32 %s244, 1
        %s1982 = scalar_lea.sflag [#allocation12], %s1981
        %s1983 = sand.u32 %s244, 1
        %s1984 = smul.addr %s1983, 256
        %s1985 = scalar_lea.vmem [#allocation11], %s1984
        // Predicated region
        $region69: #{tpu_custom_call.1} parent=51 // pred_check
          %p1986 = pneg %p228
        $region70: #{tpu_custom_call.1} parent=51 // pred_check_branch
          %1988 = sbr.rel (%p1986) target = $region72
        $region71: #{tpu_custom_call.1} parent=51 // pred_region
          %s1990 = ssub.s32 4096, 4096
          %1991 = vsyncadd %s1977, %s1990
          %s1992 = smul.addr %s32, 32
          %s1993 = smul.addr %s1992, 128
          %s1994 = scalar_lea.hbm %s8, %s1993
          %s1995 = sshll.u32 %s1980, 4
          %s1996 = int_to_ptr.vmem [resolvable:$true] %s1995
          %2001 = dma.vmem_to_hbm [thread:$0]  %s1996, 4096, %s1994, %s1977, 256, 256, 16
        $region72: #{tpu_custom_call.1} parent=51 // pred_fallthru
          _
        // Predicated region
        $region73: #{tpu_custom_call.1} parent=51 // pred_check
          %p2002 = pneg %p254
        $region74: #{tpu_custom_call.1} parent=51 // pred_check_branch
          %2004 = sbr.rel (%p2002) target = $region76
        $region75: #{tpu_custom_call.1} parent=51 // pred_region
          %s2006 = ssub.s32 4096, 4096
          %2007 = vsyncadd %s1982, %s2006
          %s2008 = smul.addr %s32, 32
          %s2009 = smul.addr %s2008, 128
          %s2010 = scalar_lea.hbm %s9, %s2009
          %s2011 = sshll.u32 %s1985, 4
          %s2012 = int_to_ptr.vmem [resolvable:$true] %s2011
          %2017 = dma.vmem_to_hbm [thread:$0]  %s2012, 4096, %s2010, %s1982, 128, 128, 8
        $region76: #{tpu_custom_call.1} parent=51 // pred_fallthru
          _
      $region52: #{tpu_custom_call.1} parent=5 // pred_fallthru
        _
      %p2018 = scmp.le.s32.totalorder 2, %s27
      // Predicated region
      $region77: #{tpu_custom_call.1} parent=5 // pred_check
        %p2019 = pneg %p2018
      $region78: #{tpu_custom_call.1} parent=5 // pred_check_branch
        %2021 = sbr.rel (%p2019) target = $region80
      $region79: #{tpu_custom_call.1} parent=5 // pred_region
        %s2022 = ssub.s32 %s27, 2
        // Predicated region
        $region81: #{tpu_custom_call.1} parent=79 // pred_check
          %p2023 = pneg %p234
        $region82: #{tpu_custom_call.1} parent=79 // pred_check_branch
          %2025 = sbr.rel (%p2023) target = $region84
        $region83: #{tpu_custom_call.1} parent=79 // pred_region
          %s2026 = sand.u32 %s219, 1
          %s2027 = scalar_lea.sflag [#allocation4], %s2026
          %s2028 = sand.u32 %s219, 1
          %s2029 = smul.addr %s2028, 256
          %s2030 = scalar_lea.vmem [#allocation10], %s2029
          %2031 = dma.done %s2027, 4096
        $region84: #{tpu_custom_call.1} parent=79 // pred_fallthru
          _
        // Predicated region
        $region85: #{tpu_custom_call.1} parent=79 // pred_check
          %p2032 = pneg %p260
        $region86: #{tpu_custom_call.1} parent=79 // pred_check_branch
          %2034 = sbr.rel (%p2032) target = $region88
        $region87: #{tpu_custom_call.1} parent=79 // pred_region
          %s2035 = sand.u32 %s245, 1
          %s2036 = scalar_lea.sflag [#allocation12], %s2035
          %s2037 = sand.u32 %s245, 1
          %s2038 = smul.addr %s2037, 256
          %s2039 = scalar_lea.vmem [#allocation11], %s2038
          %2040 = dma.done %s2036, 4096
        $region88: #{tpu_custom_call.1} parent=79 // pred_fallthru
          _
      $region80: #{tpu_custom_call.1} parent=5 // pred_fallthru
        _
    $region6: #{tpu_custom_call.1} parent=1 // loop_footer
      %s31 = sadd.s32 1, %s27
    $region7: #{tpu_custom_call.1} parent=1 // loop_footer_branch
      %26 = sbr.rel target = $region3
    $region8: #{tpu_custom_call.1} parent=1 // loop_exit
      _
    %2041 = vsyncpa [#allocation3], 1
    %s2042 = scalar_lea.sflag [#allocation3], 1
    %2043 = vsyncpa %s2042, 1
    %2044 = vsyncpa [#allocation6], 1
    %2045 = vsyncpa [#allocation9], 1
    %2046 = vsyncpa [#allocation4], 1
    %s2047 = scalar_lea.sflag [#allocation4], 1
    %2048 = vsyncpa %s2047, 1
    %2049 = vsyncpa [#allocation12], 1
    %s2050 = scalar_lea.sflag [#allocation12], 1
    %2051 = vsyncpa %s2050, 1

</llo_original>
